<compile_context>
chip_gen: v7x
topology: tpu7x:2x2x1
jax: 0.10.0
libtpu: 0.0.40
codegen_flags: <defaults>
</compile_context>

<pallas_src>
import functools

import jax
import jax.numpy as jnp
from jax import lax
from jax.experimental import pallas as pl
from jax.experimental.pallas import tpu as pltpu

# ----------------------------- tiny BERT config ------------------------------
VOCAB = 128
HIDDEN = 32
HEADS = 2
HEAD_DIM = HIDDEN // HEADS
INTERMEDIATE = 64
NUM_LAYERS = 2
MAX_POS = 64
TYPE_VOCAB = 2
NUM_LABELS = 2
LN_EPS = 1e-12
LANE = 128                       # lane-dense padding width

# ---- packed slab layout ----
# w1:  [NUM_LAYERS+1, HIDDEN, 384] bf16
#   per layer l:  lanes [0,128)   qkv_w (Q pre-scaled by 1/sqrt(d), zero-padded)
#                 lanes [128,256) i_w   (zero-padded)
#                 lanes [256,288) ao_w
#   extra row NUM_LAYERS: lanes [0,128) cls_w (padded), lanes [256,288) pool_w
QKV_OFF, I_OFF, AO_OFF = 0, 128, 256
W1_LANES = 384
CLS_OFF, POOL_OFF = 0, 256
# w2:  [NUM_LAYERS, 128, HIDDEN] bf16 : o_w with rows >= INTERMEDIATE zeroed.
# pvec: [22, 128] f32 : one parameter vector per row (biases / LN gamma,beta).
PROWS_PER_LAYER = 8
(R_QKV_B, R_AO_B, R_LN1_G, R_LN1_B, R_I_B, R_O_B, R_LN2_G, R_LN2_B) = range(8)
G_BASE = NUM_LAYERS * PROWS_PER_LAYER
(R_EMB_LN_G, R_EMB_LN_B, R_POOL_B, R_CLS_B, R_TYPE0, R_TYPE1) = (
    G_BASE + i for i in range(6))
PVEC_ROWS = G_BASE + 6

_VMEM = pl.BlockSpec(memory_space=pltpu.MemorySpace.VMEM)


# ----------------------------- in-kernel helpers ------------------------------
def _mm(a, w_bf16):
    """MXU matmul: bf16 inputs (weights pre-cast), f32 accumulation."""
    return jnp.dot(a.astype(jnp.bfloat16), w_bf16,
                   preferred_element_type=jnp.float32)


def _ln(x, g, b):
    """LayerNorm over the last dim (f32 statistics)."""
    mean = jnp.mean(x, axis=-1, keepdims=True)
    var = jnp.mean((x - mean) ** 2, axis=-1, keepdims=True)
    return (x - mean) * lax.rsqrt(var + LN_EPS) * g + b


# ------------------------------ fused BERT kernel -----------------------------
def _bert_kernel(tok_ref, bias_ref, emb_ref, w1_ref, w2_ref, p_ref, out_ref,
                 *, seq):
    BS = tok_ref.shape[0]
    nb = BS // seq                                   # batch size
    H, D = HIDDEN, HEAD_DIM

    def pv(row, width=HIDDEN):                       # one [1,width] f32 param row
        return p_ref[row:row + 1, 0:width]

    # ---------------- embeddings: gathers as one-hot bf16 matmuls ------------
    ids = tok_ref[:, 0:1]                            # [BS,1] int32
    ttf = tok_ref[:, 1:2].astype(jnp.float32)        # token-type in {0,1}
    pos = tok_ref[:, 2:3]

    word_oh = jnp.where(
        ids == lax.broadcasted_iota(jnp.int32, (BS, VOCAB), 1),
        1.0, 0.0).astype(jnp.bfloat16)
    pos_oh = jnp.where(
        pos == lax.broadcasted_iota(jnp.int32, (BS, MAX_POS), 1),
        1.0, 0.0).astype(jnp.bfloat16)
    emb = (jnp.dot(word_oh, emb_ref[0:VOCAB, :],
                   preferred_element_type=jnp.float32)
           + jnp.dot(pos_oh, emb_ref[VOCAB:VOCAB + MAX_POS, :],
                     preferred_element_type=jnp.float32))
    t0, t1 = pv(R_TYPE0), pv(R_TYPE1)                # type vocab = 2 -> exact lerp
    emb = emb + t0 + ttf * (t1 - t0)

    x = _ln(emb, pv(R_EMB_LN_G), pv(R_EMB_LN_B))     # [BS, H]

    # additive attention bias, hoisted once: 0 where (same sequence AND key
    # attended), -1e9 otherwise.  Masks cross-sequence pairs so attention can
    # run over all BS rows with plain rank-2 matmuls.
    bias = bias_ref[...]                             # [BS, BS]

    for l in range(NUM_LAYERS):
        r = l * PROWS_PER_LAYER

        # ---- fused QKV projection, lane-padded to 128 (scale folded in Q) ----
        qkv = _mm(x, w1_ref[l, :, QKV_OFF:QKV_OFF + LANE]) + pv(r + R_QKV_B, LANE)

        # ---- multi-head attention (all B*S rows per head in one 2-D dot) ----
        attn = jnp.zeros((BS, H), jnp.float32)
        for h in range(HEADS):
            q = qkv[:, h * D:(h + 1) * D].astype(jnp.bfloat16)
            k = qkv[:, H + h * D:H + (h + 1) * D].astype(jnp.bfloat16)
            v = qkv[:, 2 * H + h * D:2 * H + (h + 1) * D].astype(jnp.bfloat16)

            s = jnp.einsum("qd,kd->qk", q, k,
                           preferred_element_type=jnp.float32) + bias
            s = s - jnp.max(s, axis=-1, keepdims=True)
            p = jnp.exp(s)
            p = p * pl.reciprocal(jnp.sum(p, axis=-1, keepdims=True), approx=True)

            ctx = jnp.dot(p.astype(jnp.bfloat16), v,
                          preferred_element_type=jnp.float32)      # [BS, D]
            # output projection accumulated per head (avoids a lane concat):
            #   concat_h(ctx_h) @ W_o == sum_h ctx_h @ W_o[h*D:(h+1)*D, :]
            attn = attn + _mm(ctx, w1_ref[l, h * D:(h + 1) * D,
                                          AO_OFF:AO_OFF + H])
        attn = attn + pv(r + R_AO_B)

        # ---- residual + LN1 ----
        x = _ln(x + attn, pv(r + R_LN1_G), pv(r + R_LN1_B))

        # ---- FFN (lane-padded intermediate), residual + LN2 ----
        # NOTE: tanh-approx GELU (HF exact erf-GELU differs by <1e-3)
        inter = jax.nn.gelu(_mm(x, w1_ref[l, :, I_OFF:I_OFF + LANE])
                            + pv(r + R_I_B, LANE), approximate=True)
        ffn = _mm(inter, w2_ref[l]) + pv(r + R_O_B)
        x = _ln(x + ffn, pv(r + R_LN2_G), pv(r + R_LN2_B))

    # ---- pooler (CLS token = row b*seq, direct row slices) + classifier ----
    pooled = jnp.concatenate([x[b * seq:b * seq + 1, :] for b in range(nb)],
                             axis=0)                                # [B, H]
    pooled = jnp.tanh(_mm(pooled, w1_ref[NUM_LAYERS, :, POOL_OFF:POOL_OFF + H])
                      + pv(R_POOL_B))
    logits = (_mm(pooled, w1_ref[NUM_LAYERS, :, CLS_OFF:CLS_OFF + LANE])
              + pv(R_CLS_B, LANE))                                  # [B, 128]
    out_ref[...] = logits.astype(out_ref.dtype)                     # lane-dense


# ------------------------------ parameter setup ------------------------------
def _normal(key, shape):
    return 0.02 * jax.random.normal(key, shape, dtype=jnp.float32)


def init_packed_params(key):
    """Deterministic synthetic weights, packed into 4 DMA-friendly slabs."""
    ks = iter(jax.random.split(key, 8 + NUM_LAYERS * 4))
    word = _normal(next(ks), (VOCAB, HIDDEN))
    posw = _normal(next(ks), (MAX_POS, HIDDEN))
    typw = _normal(next(ks), (TYPE_VOCAB, HIDDEN))
    pool_w = _normal(next(ks), (HIDDEN, HIDDEN))
    cls_w = _normal(next(ks), (HIDDEN, NUM_LABELS))

    scale = HEAD_DIM ** -0.5
    w1 = jnp.zeros((NUM_LAYERS + 1, HIDDEN, W1_LANES), jnp.float32)
    w2 = jnp.zeros((NUM_LAYERS, LANE, HIDDEN), jnp.float32)
    pvec = jnp.zeros((PVEC_ROWS, LANE), jnp.float32)

    for l in range(NUM_LAYERS):
        qkv_w = _normal(next(ks), (HIDDEN, 3 * HIDDEN))
        qkv_w = qkv_w.at[:, :HIDDEN].multiply(scale)   # fold 1/sqrt(d) into Q
        ao_w = _normal(next(ks), (HIDDEN, HIDDEN))
        i_w = _normal(next(ks), (HIDDEN, INTERMEDIATE))
        o_w = _normal(next(ks), (INTERMEDIATE, HIDDEN))

        w1 = w1.at[l, :, QKV_OFF:QKV_OFF + 3 * HIDDEN].set(qkv_w)
        w1 = w1.at[l, :, I_OFF:I_OFF + INTERMEDIATE].set(i_w)
        w1 = w1.at[l, :, AO_OFF:AO_OFF + HIDDEN].set(ao_w)
        w2 = w2.at[l, :INTERMEDIATE, :].set(o_w)

        r = l * PROWS_PER_LAYER
        # all dense biases are zero-init (Q-lane scaling of qkv_b would go here)
        pvec = pvec.at[r + R_LN1_G, :HIDDEN].set(1.0)
        pvec = pvec.at[r + R_LN2_G, :HIDDEN].set(1.0)

    w1 = w1.at[NUM_LAYERS, :, CLS_OFF:CLS_OFF + NUM_LABELS].set(cls_w)
    w1 = w1.at[NUM_LAYERS, :, POOL_OFF:POOL_OFF + HIDDEN].set(pool_w)
    pvec = pvec.at[R_EMB_LN_G, :HIDDEN].set(1.0)
    pvec = pvec.at[R_TYPE0, :HIDDEN].set(typw[0])
    pvec = pvec.at[R_TYPE1, :HIDDEN].set(typw[1])

    emb_tab = jnp.concatenate([word, posw], axis=0)     # [192, 32]

    # weights pre-cast to bf16; small biases / LN params stay f32
    return {"emb_tab": emb_tab.astype(jnp.bfloat16),
            "w1": w1.astype(jnp.bfloat16),
            "w2": w2.astype(jnp.bfloat16),
            "pvec": pvec}


# -------------------------------- forward pass -------------------------------
def bert_forward(params, ids, mask, token_type_ids):
    """Returns logits [B, NUM_LABELS] — matches HFAutoModel.forward semantics."""
    B, S = ids.shape
    BS = B * S

    # tiny integer metadata for the in-kernel one-hot gathers: [BS, 3]
    tok = jnp.stack([ids.reshape(-1),
                     token_type_ids.reshape(-1),
                     jnp.tile(jnp.arange(S, dtype=jnp.int32), B)],
                    axis=1).astype(jnp.int32)

    # additive attention bias over all (query,key) row pairs:
    # 0 where same sequence AND key attended, else -1e9 (masks padding and
    # cross-sequence pairs).  [BS, BS] f32 ~ 1 KB.
    row_seq = jnp.arange(BS, dtype=jnp.int32) // S
    same = (row_seq[:, None] == row_seq[None, :]).astype(jnp.float32)
    attend = mask.astype(jnp.float32).reshape(1, BS)
    attn_bias = (same * attend - 1.0) * 1e9

    kernel = functools.partial(_bert_kernel, seq=S)
    logits_padded = pl.pallas_call(
        kernel,
        out_shape=jax.ShapeDtypeStruct((B, LANE), jnp.float32),
        in_specs=[_VMEM] * 6,
        out_specs=_VMEM,
    )(tok, attn_bias, params["emb_tab"], params["w1"], params["w2"],
      params["pvec"])

    return logits_padded[:, :NUM_LABELS]


# ------------------------------------ main -----------------------------------
if __name__ == "__main__":
    params = init_packed_params(jax.random.PRNGKey(0))

    B, S = 2, 8
    kid, _ = jax.random.split(jax.random.PRNGKey(0))
    ids = jax.random.randint(kid, (B, S), 0, VOCAB, dtype=jnp.int32)
    mask = jnp.ones((B, S), jnp.int32).at[1, 6:].set(0)   # pad last 2 tokens of row 1
    token_type_ids = jnp.zeros((B, S), jnp.int32)

    fwd = jax.jit(lambda i, m, t: bert_forward(params, i, m, t))
    logits = fwd(ids, mask, token_type_ids)
    jax.block_until_ready(logits)

    assert logits.shape == (B, NUM_LABELS) and logits.dtype == jnp.float32
    assert bool(jnp.all(jnp.isfinite(logits)))
    print("KERNEL_OK")
</pallas_src>

<mosaic_0001>
module attributes {stable_mosaic.version = 11 : i64} {
  func.func @_bert_kernel(%arg0: memref<16x3xi32, #tpu.memory_space<vmem>>, %arg1: memref<16x16xf32, #tpu.memory_space<vmem>>, %arg2: memref<192x32xbf16, #tpu.memory_space<vmem>>, %arg3: memref<3x32x384xbf16, #tpu.memory_space<vmem>>, %arg4: memref<2x128x32xbf16, #tpu.memory_space<vmem>>, %arg5: memref<22x128xf32, #tpu.memory_space<vmem>>, %arg6: memref<2x128xf32, #tpu.memory_space<vmem>>) attributes {dimension_semantics = [], scalar_prefetch = 0 : i64, scratch_operands = 0 : i64, tpu.core_type = #tpu.core_type<tc>} {
    %c0 = arith.constant 0 : index
    %c0_0 = arith.constant 0 : index
    %0 = vector.load %arg0[%c0, %c0_0] : memref<16x3xi32, #tpu.memory_space<vmem>>, vector<16x1xi32>
    %c0_1 = arith.constant 0 : index
    %c1 = arith.constant 1 : index
    %1 = vector.load %arg0[%c0_1, %c1] : memref<16x3xi32, #tpu.memory_space<vmem>>, vector<16x1xi32>
    %2 = arith.sitofp %1 : vector<16x1xi32> to vector<16x1xf32>
    %c0_2 = arith.constant 0 : index
    %c2 = arith.constant 2 : index
    %3 = vector.load %arg0[%c0_2, %c2] : memref<16x3xi32, #tpu.memory_space<vmem>>, vector<16x1xi32>
    %4 = tpu.iota {dimensions = array<i32: 1>} : vector<16x128xi32>
    %5 = vector.broadcast %0 : vector<16x1xi32> to vector<16x128xi32>
    %6 = arith.cmpi eq, %5, %4 : vector<16x128xi32>
    %cst = arith.constant 1.000000e+00 : f32
    %cst_3 = arith.constant 0.000000e+00 : f32
    %7 = vector.broadcast %cst : f32 to vector<16x128xf32>
    %8 = vector.broadcast %cst_3 : f32 to vector<16x128xf32>
    %9 = arith.select %6, %7, %8 : vector<16x128xi1>, vector<16x128xf32>
    %10 = arith.truncf %9 : vector<16x128xf32> to vector<16x128xbf16>
    %11 = tpu.iota {dimensions = array<i32: 1>} : vector<16x64xi32>
    %12 = vector.broadcast %3 : vector<16x1xi32> to vector<16x64xi32>
    %13 = arith.cmpi eq, %12, %11 : vector<16x64xi32>
    %cst_4 = arith.constant 1.000000e+00 : f32
    %cst_5 = arith.constant 0.000000e+00 : f32
    %14 = vector.broadcast %cst_4 : f32 to vector<16x64xf32>
    %15 = vector.broadcast %cst_5 : f32 to vector<16x64xf32>
    %16 = arith.select %13, %14, %15 : vector<16x64xi1>, vector<16x64xf32>
    %17 = arith.truncf %16 : vector<16x64xf32> to vector<16x64xbf16>
    %c0_6 = arith.constant 0 : index
    %c0_7 = arith.constant 0 : index
    %18 = vector.load %arg2[%c0_6, %c0_7] : memref<192x32xbf16, #tpu.memory_space<vmem>>, vector<128x32xbf16>
    %cst_8 = arith.constant dense<0.000000e+00> : vector<16x32xf32>
    %19 = tpu.matmul %10, %18, %cst_8 {dimension_numbers = #tpu.dot_dimension_numbers<[1], [0], [0], [1], [0, 0, 1, 1], [], []>} : vector<16x128xbf16>, vector<128x32xbf16>, vector<16x32xf32> -> vector<16x32xf32>
    %c128 = arith.constant 128 : index
    %c0_9 = arith.constant 0 : index
    %20 = vector.load %arg2[%c128, %c0_9] : memref<192x32xbf16, #tpu.memory_space<vmem>>, vector<64x32xbf16>
    %cst_10 = arith.constant dense<0.000000e+00> : vector<16x32xf32>
    %21 = tpu.matmul %17, %20, %cst_10 {dimension_numbers = #tpu.dot_dimension_numbers<[1], [0], [0], [1], [0, 0, 1, 1], [], []>} : vector<16x64xbf16>, vector<64x32xbf16>, vector<16x32xf32> -> vector<16x32xf32>
    %22 = arith.addf %19, %21 : vector<16x32xf32>
    %c20 = arith.constant 20 : index
    %c0_11 = arith.constant 0 : index
    %23 = vector.load %arg5[%c20, %c0_11] : memref<22x128xf32, #tpu.memory_space<vmem>>, vector<1x32xf32>
    %c21 = arith.constant 21 : index
    %c0_12 = arith.constant 0 : index
    %24 = vector.load %arg5[%c21, %c0_12] : memref<22x128xf32, #tpu.memory_space<vmem>>, vector<1x32xf32>
    %25 = vector.broadcast %23 : vector<1x32xf32> to vector<16x32xf32>
    %26 = arith.addf %22, %25 : vector<16x32xf32>
    %27 = arith.subf %24, %23 : vector<1x32xf32>
    %28 = vector.broadcast %2 : vector<16x1xf32> to vector<16x32xf32>
    %29 = vector.broadcast %27 : vector<1x32xf32> to vector<16x32xf32>
    %30 = arith.mulf %28, %29 : vector<16x32xf32>
    %31 = arith.addf %26, %30 : vector<16x32xf32>
    %c16 = arith.constant 16 : index
    %c0_13 = arith.constant 0 : index
    %32 = vector.load %arg5[%c16, %c0_13] : memref<22x128xf32, #tpu.memory_space<vmem>>, vector<1x32xf32>
    %c17 = arith.constant 17 : index
    %c0_14 = arith.constant 0 : index
    %33 = vector.load %arg5[%c17, %c0_14] : memref<22x128xf32, #tpu.memory_space<vmem>>, vector<1x32xf32>
    %cst_15 = arith.constant dense<0.000000e+00> : vector<16xf32>
    %34 = vector.multi_reduction <add>, %31, %cst_15 [1] : vector<16x32xf32> to vector<16xf32>
    %35 = vector.shape_cast %34 : vector<16xf32> to vector<16x1xf32>
    %cst_16 = arith.constant 3.200000e+01 : f32
    %36 = vector.broadcast %cst_16 : f32 to vector<16x1xf32>
    %37 = arith.divf %35, %36 : vector<16x1xf32>
    %38 = vector.broadcast %37 : vector<16x1xf32> to vector<16x32xf32>
    %39 = arith.subf %31, %38 : vector<16x32xf32>
    %40 = arith.mulf %39, %39 : vector<16x32xf32>
    %cst_17 = arith.constant dense<0.000000e+00> : vector<16xf32>
    %41 = vector.multi_reduction <add>, %40, %cst_17 [1] : vector<16x32xf32> to vector<16xf32>
    %42 = vector.shape_cast %41 : vector<16xf32> to vector<16x1xf32>
    %cst_18 = arith.constant 3.200000e+01 : f32
    %43 = vector.broadcast %cst_18 : f32 to vector<16x1xf32>
    %44 = arith.divf %42, %43 : vector<16x1xf32>
    %45 = vector.broadcast %37 : vector<16x1xf32> to vector<16x32xf32>
    %46 = arith.subf %31, %45 : vector<16x32xf32>
    %cst_19 = arith.constant 9.99999996E-13 : f32
    %47 = vector.broadcast %cst_19 : f32 to vector<16x1xf32>
    %48 = arith.addf %44, %47 : vector<16x1xf32>
    %49 = math.rsqrt %48 : vector<16x1xf32>
    %50 = vector.broadcast %49 : vector<16x1xf32> to vector<16x32xf32>
    %51 = arith.mulf %46, %50 : vector<16x32xf32>
    %52 = vector.broadcast %32 : vector<1x32xf32> to vector<16x32xf32>
    %53 = arith.mulf %51, %52 : vector<16x32xf32>
    %54 = vector.broadcast %33 : vector<1x32xf32> to vector<16x32xf32>
    %55 = arith.addf %53, %54 : vector<16x32xf32>
    %c0_20 = arith.constant 0 : index
    %c0_21 = arith.constant 0 : index
    %56 = vector.load %arg1[%c0_20, %c0_21] : memref<16x16xf32, #tpu.memory_space<vmem>>, vector<16x16xf32>
    %c0_22 = arith.constant 0 : index
    %c0_23 = arith.constant 0 : index
    %c0_24 = arith.constant 0 : index
    %57 = vector.load %arg3[%c0_22, %c0_23, %c0_24] : memref<3x32x384xbf16, #tpu.memory_space<vmem>>, vector<1x32x128xbf16>
    %58 = vector.shape_cast %57 : vector<1x32x128xbf16> to vector<32x128xbf16>
    %59 = arith.truncf %55 : vector<16x32xf32> to vector<16x32xbf16>
    %cst_25 = arith.constant dense<0.000000e+00> : vector<16x128xf32>
    %60 = tpu.matmul %59, %58, %cst_25 {dimension_numbers = #tpu.dot_dimension_numbers<[1], [0], [0], [1], [0, 0, 1, 1], [], []>} : vector<16x32xbf16>, vector<32x128xbf16>, vector<16x128xf32> -> vector<16x128xf32>
    %c0_26 = arith.constant 0 : index
    %c0_27 = arith.constant 0 : index
    %61 = vector.load %arg5[%c0_26, %c0_27] : memref<22x128xf32, #tpu.memory_space<vmem>>, vector<1x128xf32>
    %62 = vector.broadcast %61 : vector<1x128xf32> to vector<16x128xf32>
    %63 = arith.addf %60, %62 : vector<16x128xf32>
    %cst_28 = arith.constant 0.000000e+00 : f32
    %64 = vector.broadcast %cst_28 : f32 to vector<16x32xf32>
    %65 = vector.extract_strided_slice %63 {offsets = [0, 0], sizes = [16, 16], strides = [1, 1]} : vector<16x128xf32> to vector<16x16xf32>
    %66 = arith.truncf %65 : vector<16x16xf32> to vector<16x16xbf16>
    %67 = vector.extract_strided_slice %63 {offsets = [0, 32], sizes = [16, 16], strides = [1, 1]} : vector<16x128xf32> to vector<16x16xf32>
    %68 = arith.truncf %67 : vector<16x16xf32> to vector<16x16xbf16>
    %69 = vector.extract_strided_slice %63 {offsets = [0, 64], sizes = [16, 16], strides = [1, 1]} : vector<16x128xf32> to vector<16x16xf32>
    %70 = arith.truncf %69 : vector<16x16xf32> to vector<16x16xbf16>
    "tpu.trace_start"() <{level = 10 : i32, message = "qd,kd->qk"}> : () -> ()
    %cst_29 = arith.constant dense<0.000000e+00> : vector<16x16xf32>
    %71 = tpu.matmul %66, %68, %cst_29 {dimension_numbers = #tpu.dot_dimension_numbers<[1], [1], [0], [0], [0, 0, 1, 0], [], []>} : vector<16x16xbf16>, vector<16x16xbf16>, vector<16x16xf32> -> vector<16x16xf32>
    "tpu.trace_stop"() : () -> ()
    %72 = arith.addf %71, %56 : vector<16x16xf32>
    %cst_30 = arith.constant dense<0xFF800000> : vector<16xf32>
    %73 = vector.multi_reduction <maximumf>, %72, %cst_30 [1] : vector<16x16xf32> to vector<16xf32>
    %74 = vector.shape_cast %73 : vector<16xf32> to vector<16x1xf32>
    %75 = vector.broadcast %74 : vector<16x1xf32> to vector<16x16xf32>
    %76 = arith.subf %72, %75 : vector<16x16xf32>
    %77 = math.exp %76 : vector<16x16xf32>
    %cst_31 = arith.constant dense<0.000000e+00> : vector<16xf32>
    %78 = vector.multi_reduction <add>, %77, %cst_31 [1] : vector<16x16xf32> to vector<16xf32>
    %79 = vector.shape_cast %78 : vector<16xf32> to vector<16x1xf32>
    %80 = tpu.reciprocal %79 {approx = true} : vector<16x1xf32> -> vector<16x1xf32>
    %81 = vector.broadcast %80 : vector<16x1xf32> to vector<16x16xf32>
    %82 = arith.mulf %77, %81 : vector<16x16xf32>
    %83 = arith.truncf %82 : vector<16x16xf32> to vector<16x16xbf16>
    %cst_32 = arith.constant dense<0.000000e+00> : vector<16x16xf32>
    %84 = tpu.matmul %83, %70, %cst_32 {dimension_numbers = #tpu.dot_dimension_numbers<[1], [0], [0], [1], [0, 0, 1, 1], [], []>} : vector<16x16xbf16>, vector<16x16xbf16>, vector<16x16xf32> -> vector<16x16xf32>
    %c0_33 = arith.constant 0 : index
    %c0_34 = arith.constant 0 : index
    %c256 = arith.constant 256 : index
    %85 = vector.load %arg3[%c0_33, %c0_34, %c256] : memref<3x32x384xbf16, #tpu.memory_space<vmem>>, vector<1x16x32xbf16>
    %86 = vector.shape_cast %85 : vector<1x16x32xbf16> to vector<16x32xbf16>
    %87 = arith.truncf %84 : vector<16x16xf32> to vector<16x16xbf16>
    %cst_35 = arith.constant dense<0.000000e+00> : vector<16x32xf32>
    %88 = tpu.matmul %87, %86, %cst_35 {dimension_numbers = #tpu.dot_dimension_numbers<[1], [0], [0], [1], [0, 0, 1, 1], [], []>} : vector<16x16xbf16>, vector<16x32xbf16>, vector<16x32xf32> -> vector<16x32xf32>
    %89 = arith.addf %64, %88 : vector<16x32xf32>
    %90 = vector.extract_strided_slice %63 {offsets = [0, 16], sizes = [16, 16], strides = [1, 1]} : vector<16x128xf32> to vector<16x16xf32>
    %91 = arith.truncf %90 : vector<16x16xf32> to vector<16x16xbf16>
    %92 = vector.extract_strided_slice %63 {offsets = [0, 48], sizes = [16, 16], strides = [1, 1]} : vector<16x128xf32> to vector<16x16xf32>
    %93 = arith.truncf %92 : vector<16x16xf32> to vector<16x16xbf16>
    %94 = vector.extract_strided_slice %63 {offsets = [0, 80], sizes = [16, 16], strides = [1, 1]} : vector<16x128xf32> to vector<16x16xf32>
    %95 = arith.truncf %94 : vector<16x16xf32> to vector<16x16xbf16>
    "tpu.trace_start"() <{level = 10 : i32, message = "qd,kd->qk"}> : () -> ()
    %cst_36 = arith.constant dense<0.000000e+00> : vector<16x16xf32>
    %96 = tpu.matmul %91, %93, %cst_36 {dimension_numbers = #tpu.dot_dimension_numbers<[1], [1], [0], [0], [0, 0, 1, 0], [], []>} : vector<16x16xbf16>, vector<16x16xbf16>, vector<16x16xf32> -> vector<16x16xf32>
    "tpu.trace_stop"() : () -> ()
    %97 = arith.addf %96, %56 : vector<16x16xf32>
    %cst_37 = arith.constant dense<0xFF800000> : vector<16xf32>
    %98 = vector.multi_reduction <maximumf>, %97, %cst_37 [1] : vector<16x16xf32> to vector<16xf32>
    %99 = vector.shape_cast %98 : vector<16xf32> to vector<16x1xf32>
    %100 = vector.broadcast %99 : vector<16x1xf32> to vector<16x16xf32>
    %101 = arith.subf %97, %100 : vector<16x16xf32>
    %102 = math.exp %101 : vector<16x16xf32>
    %cst_38 = arith.constant dense<0.000000e+00> : vector<16xf32>
    %103 = vector.multi_reduction <add>, %102, %cst_38 [1] : vector<16x16xf32> to vector<16xf32>
    %104 = vector.shape_cast %103 : vector<16xf32> to vector<16x1xf32>
    %105 = tpu.reciprocal %104 {approx = true} : vector<16x1xf32> -> vector<16x1xf32>
    %106 = vector.broadcast %105 : vector<16x1xf32> to vector<16x16xf32>
    %107 = arith.mulf %102, %106 : vector<16x16xf32>
    %108 = arith.truncf %107 : vector<16x16xf32> to vector<16x16xbf16>
    %cst_39 = arith.constant dense<0.000000e+00> : vector<16x16xf32>
    %109 = tpu.matmul %108, %95, %cst_39 {dimension_numbers = #tpu.dot_dimension_numbers<[1], [0], [0], [1], [0, 0, 1, 1], [], []>} : vector<16x16xbf16>, vector<16x16xbf16>, vector<16x16xf32> -> vector<16x16xf32>
    %c0_40 = arith.constant 0 : index
    %c16_41 = arith.constant 16 : index
    %c256_42 = arith.constant 256 : index
    %110 = vector.load %arg3[%c0_40, %c16_41, %c256_42] : memref<3x32x384xbf16, #tpu.memory_space<vmem>>, vector<1x16x32xbf16>
    %111 = vector.shape_cast %110 : vector<1x16x32xbf16> to vector<16x32xbf16>
    %112 = arith.truncf %109 : vector<16x16xf32> to vector<16x16xbf16>
    %cst_43 = arith.constant dense<0.000000e+00> : vector<16x32xf32>
    %113 = tpu.matmul %112, %111, %cst_43 {dimension_numbers = #tpu.dot_dimension_numbers<[1], [0], [0], [1], [0, 0, 1, 1], [], []>} : vector<16x16xbf16>, vector<16x32xbf16>, vector<16x32xf32> -> vector<16x32xf32>
    %114 = arith.addf %89, %113 : vector<16x32xf32>
    %c1_44 = arith.constant 1 : index
    %c0_45 = arith.constant 0 : index
    %115 = vector.load %arg5[%c1_44, %c0_45] : memref<22x128xf32, #tpu.memory_space<vmem>>, vector<1x32xf32>
    %116 = vector.broadcast %115 : vector<1x32xf32> to vector<16x32xf32>
    %117 = arith.addf %114, %116 : vector<16x32xf32>
    %118 = arith.addf %55, %117 : vector<16x32xf32>
    %c2_46 = arith.constant 2 : index
    %c0_47 = arith.constant 0 : index
    %119 = vector.load %arg5[%c2_46, %c0_47] : memref<22x128xf32, #tpu.memory_space<vmem>>, vector<1x32xf32>
    %c3 = arith.constant 3 : index
    %c0_48 = arith.constant 0 : index
    %120 = vector.load %arg5[%c3, %c0_48] : memref<22x128xf32, #tpu.memory_space<vmem>>, vector<1x32xf32>
    %cst_49 = arith.constant dense<0.000000e+00> : vector<16xf32>
    %121 = vector.multi_reduction <add>, %118, %cst_49 [1] : vector<16x32xf32> to vector<16xf32>
    %122 = vector.shape_cast %121 : vector<16xf32> to vector<16x1xf32>
    %cst_50 = arith.constant 3.200000e+01 : f32
    %123 = vector.broadcast %cst_50 : f32 to vector<16x1xf32>
    %124 = arith.divf %122, %123 : vector<16x1xf32>
    %125 = vector.broadcast %124 : vector<16x1xf32> to vector<16x32xf32>
    %126 = arith.subf %118, %125 : vector<16x32xf32>
    %127 = arith.mulf %126, %126 : vector<16x32xf32>
    %cst_51 = arith.constant dense<0.000000e+00> : vector<16xf32>
    %128 = vector.multi_reduction <add>, %127, %cst_51 [1] : vector<16x32xf32> to vector<16xf32>
    %129 = vector.shape_cast %128 : vector<16xf32> to vector<16x1xf32>
    %cst_52 = arith.constant 3.200000e+01 : f32
    %130 = vector.broadcast %cst_52 : f32 to vector<16x1xf32>
    %131 = arith.divf %129, %130 : vector<16x1xf32>
    %132 = vector.broadcast %124 : vector<16x1xf32> to vector<16x32xf32>
    %133 = arith.subf %118, %132 : vector<16x32xf32>
    %cst_53 = arith.constant 9.99999996E-13 : f32
    %134 = vector.broadcast %cst_53 : f32 to vector<16x1xf32>
    %135 = arith.addf %131, %134 : vector<16x1xf32>
    %136 = math.rsqrt %135 : vector<16x1xf32>
    %137 = vector.broadcast %136 : vector<16x1xf32> to vector<16x32xf32>
    %138 = arith.mulf %133, %137 : vector<16x32xf32>
    %139 = vector.broadcast %119 : vector<1x32xf32> to vector<16x32xf32>
    %140 = arith.mulf %138, %139 : vector<16x32xf32>
    %141 = vector.broadcast %120 : vector<1x32xf32> to vector<16x32xf32>
    %142 = arith.addf %140, %141 : vector<16x32xf32>
    %c0_54 = arith.constant 0 : index
    %c0_55 = arith.constant 0 : index
    %c128_56 = arith.constant 128 : index
    %143 = vector.load %arg3[%c0_54, %c0_55, %c128_56] : memref<3x32x384xbf16, #tpu.memory_space<vmem>>, vector<1x32x128xbf16>
    %144 = vector.shape_cast %143 : vector<1x32x128xbf16> to vector<32x128xbf16>
    %145 = arith.truncf %142 : vector<16x32xf32> to vector<16x32xbf16>
    %cst_57 = arith.constant dense<0.000000e+00> : vector<16x128xf32>
    %146 = tpu.matmul %145, %144, %cst_57 {dimension_numbers = #tpu.dot_dimension_numbers<[1], [0], [0], [1], [0, 0, 1, 1], [], []>} : vector<16x32xbf16>, vector<32x128xbf16>, vector<16x128xf32> -> vector<16x128xf32>
    %c4 = arith.constant 4 : index
    %c0_58 = arith.constant 0 : index
    %147 = vector.load %arg5[%c4, %c0_58] : memref<22x128xf32, #tpu.memory_space<vmem>>, vector<1x128xf32>
    %148 = vector.broadcast %147 : vector<1x128xf32> to vector<16x128xf32>
    %149 = arith.addf %146, %148 : vector<16x128xf32>
    %150 = arith.mulf %149, %149 : vector<16x128xf32>
    %151 = arith.mulf %149, %150 : vector<16x128xf32>
    %cst_59 = arith.constant 4.471500e-02 : f32
    %152 = vector.broadcast %cst_59 : f32 to vector<16x128xf32>
    %153 = arith.mulf %152, %151 : vector<16x128xf32>
    %154 = arith.addf %149, %153 : vector<16x128xf32>
    %cst_60 = arith.constant 0.797884583 : f32
    %155 = vector.broadcast %cst_60 : f32 to vector<16x128xf32>
    %156 = arith.mulf %155, %154 : vector<16x128xf32>
    %157 = math.tanh %156 : vector<16x128xf32>
    %cst_61 = arith.constant 1.000000e+00 : f32
    %158 = vector.broadcast %cst_61 : f32 to vector<16x128xf32>
    %159 = arith.addf %158, %157 : vector<16x128xf32>
    %cst_62 = arith.constant 5.000000e-01 : f32
    %160 = vector.broadcast %cst_62 : f32 to vector<16x128xf32>
    %161 = arith.mulf %160, %159 : vector<16x128xf32>
    %162 = arith.mulf %149, %161 : vector<16x128xf32>
    %c0_63 = arith.constant 0 : index
    %c0_64 = arith.constant 0 : index
    %c0_65 = arith.constant 0 : index
    %163 = vector.load %arg4[%c0_63, %c0_64, %c0_65] : memref<2x128x32xbf16, #tpu.memory_space<vmem>>, vector<1x128x32xbf16>
    %164 = vector.shape_cast %163 : vector<1x128x32xbf16> to vector<128x32xbf16>
    %165 = arith.truncf %162 : vector<16x128xf32> to vector<16x128xbf16>
    %cst_66 = arith.constant dense<0.000000e+00> : vector<16x32xf32>
    %166 = tpu.matmul %165, %164, %cst_66 {dimension_numbers = #tpu.dot_dimension_numbers<[1], [0], [0], [1], [0, 0, 1, 1], [], []>} : vector<16x128xbf16>, vector<128x32xbf16>, vector<16x32xf32> -> vector<16x32xf32>
    %c5 = arith.constant 5 : index
    %c0_67 = arith.constant 0 : index
    %167 = vector.load %arg5[%c5, %c0_67] : memref<22x128xf32, #tpu.memory_space<vmem>>, vector<1x32xf32>
    %168 = vector.broadcast %167 : vector<1x32xf32> to vector<16x32xf32>
    %169 = arith.addf %166, %168 : vector<16x32xf32>
    %170 = arith.addf %142, %169 : vector<16x32xf32>
    %c6 = arith.constant 6 : index
    %c0_68 = arith.constant 0 : index
    %171 = vector.load %arg5[%c6, %c0_68] : memref<22x128xf32, #tpu.memory_space<vmem>>, vector<1x32xf32>
    %c7 = arith.constant 7 : index
    %c0_69 = arith.constant 0 : index
    %172 = vector.load %arg5[%c7, %c0_69] : memref<22x128xf32, #tpu.memory_space<vmem>>, vector<1x32xf32>
    %cst_70 = arith.constant dense<0.000000e+00> : vector<16xf32>
    %173 = vector.multi_reduction <add>, %170, %cst_70 [1] : vector<16x32xf32> to vector<16xf32>
    %174 = vector.shape_cast %173 : vector<16xf32> to vector<16x1xf32>
    %cst_71 = arith.constant 3.200000e+01 : f32
    %175 = vector.broadcast %cst_71 : f32 to vector<16x1xf32>
    %176 = arith.divf %174, %175 : vector<16x1xf32>
    %177 = vector.broadcast %176 : vector<16x1xf32> to vector<16x32xf32>
    %178 = arith.subf %170, %177 : vector<16x32xf32>
    %179 = arith.mulf %178, %178 : vector<16x32xf32>
    %cst_72 = arith.constant dense<0.000000e+00> : vector<16xf32>
    %180 = vector.multi_reduction <add>, %179, %cst_72 [1] : vector<16x32xf32> to vector<16xf32>
    %181 = vector.shape_cast %180 : vector<16xf32> to vector<16x1xf32>
    %cst_73 = arith.constant 3.200000e+01 : f32
    %182 = vector.broadcast %cst_73 : f32 to vector<16x1xf32>
    %183 = arith.divf %181, %182 : vector<16x1xf32>
    %184 = vector.broadcast %176 : vector<16x1xf32> to vector<16x32xf32>
    %185 = arith.subf %170, %184 : vector<16x32xf32>
    %cst_74 = arith.constant 9.99999996E-13 : f32
    %186 = vector.broadcast %cst_74 : f32 to vector<16x1xf32>
    %187 = arith.addf %183, %186 : vector<16x1xf32>
    %188 = math.rsqrt %187 : vector<16x1xf32>
    %189 = vector.broadcast %188 : vector<16x1xf32> to vector<16x32xf32>
    %190 = arith.mulf %185, %189 : vector<16x32xf32>
    %191 = vector.broadcast %171 : vector<1x32xf32> to vector<16x32xf32>
    %192 = arith.mulf %190, %191 : vector<16x32xf32>
    %193 = vector.broadcast %172 : vector<1x32xf32> to vector<16x32xf32>
    %194 = arith.addf %192, %193 : vector<16x32xf32>
    %c1_75 = arith.constant 1 : index
    %c0_76 = arith.constant 0 : index
    %c0_77 = arith.constant 0 : index
    %195 = vector.load %arg3[%c1_75, %c0_76, %c0_77] : memref<3x32x384xbf16, #tpu.memory_space<vmem>>, vector<1x32x128xbf16>
    %196 = vector.shape_cast %195 : vector<1x32x128xbf16> to vector<32x128xbf16>
    %197 = arith.truncf %194 : vector<16x32xf32> to vector<16x32xbf16>
    %cst_78 = arith.constant dense<0.000000e+00> : vector<16x128xf32>
    %198 = tpu.matmul %197, %196, %cst_78 {dimension_numbers = #tpu.dot_dimension_numbers<[1], [0], [0], [1], [0, 0, 1, 1], [], []>} : vector<16x32xbf16>, vector<32x128xbf16>, vector<16x128xf32> -> vector<16x128xf32>
    %c8 = arith.constant 8 : index
    %c0_79 = arith.constant 0 : index
    %199 = vector.load %arg5[%c8, %c0_79] : memref<22x128xf32, #tpu.memory_space<vmem>>, vector<1x128xf32>
    %200 = vector.broadcast %199 : vector<1x128xf32> to vector<16x128xf32>
    %201 = arith.addf %198, %200 : vector<16x128xf32>
    %cst_80 = arith.constant 0.000000e+00 : f32
    %202 = vector.broadcast %cst_80 : f32 to vector<16x32xf32>
    %203 = vector.extract_strided_slice %201 {offsets = [0, 0], sizes = [16, 16], strides = [1, 1]} : vector<16x128xf32> to vector<16x16xf32>
    %204 = arith.truncf %203 : vector<16x16xf32> to vector<16x16xbf16>
    %205 = vector.extract_strided_slice %201 {offsets = [0, 32], sizes = [16, 16], strides = [1, 1]} : vector<16x128xf32> to vector<16x16xf32>
    %206 = arith.truncf %205 : vector<16x16xf32> to vector<16x16xbf16>
    %207 = vector.extract_strided_slice %201 {offsets = [0, 64], sizes = [16, 16], strides = [1, 1]} : vector<16x128xf32> to vector<16x16xf32>
    %208 = arith.truncf %207 : vector<16x16xf32> to vector<16x16xbf16>
    "tpu.trace_start"() <{level = 10 : i32, message = "qd,kd->qk"}> : () -> ()
    %cst_81 = arith.constant dense<0.000000e+00> : vector<16x16xf32>
    %209 = tpu.matmul %204, %206, %cst_81 {dimension_numbers = #tpu.dot_dimension_numbers<[1], [1], [0], [0], [0, 0, 1, 0], [], []>} : vector<16x16xbf16>, vector<16x16xbf16>, vector<16x16xf32> -> vector<16x16xf32>
    "tpu.trace_stop"() : () -> ()
    %210 = arith.addf %209, %56 : vector<16x16xf32>
    %cst_82 = arith.constant dense<0xFF800000> : vector<16xf32>
    %211 = vector.multi_reduction <maximumf>, %210, %cst_82 [1] : vector<16x16xf32> to vector<16xf32>
    %212 = vector.shape_cast %211 : vector<16xf32> to vector<16x1xf32>
    %213 = vector.broadcast %212 : vector<16x1xf32> to vector<16x16xf32>
    %214 = arith.subf %210, %213 : vector<16x16xf32>
    %215 = math.exp %214 : vector<16x16xf32>
    %cst_83 = arith.constant dense<0.000000e+00> : vector<16xf32>
    %216 = vector.multi_reduction <add>, %215, %cst_83 [1] : vector<16x16xf32> to vector<16xf32>
    %217 = vector.shape_cast %216 : vector<16xf32> to vector<16x1xf32>
    %218 = tpu.reciprocal %217 {approx = true} : vector<16x1xf32> -> vector<16x1xf32>
    %219 = vector.broadcast %218 : vector<16x1xf32> to vector<16x16xf32>
    %220 = arith.mulf %215, %219 : vector<16x16xf32>
    %221 = arith.truncf %220 : vector<16x16xf32> to vector<16x16xbf16>
    %cst_84 = arith.constant dense<0.000000e+00> : vector<16x16xf32>
    %222 = tpu.matmul %221, %208, %cst_84 {dimension_numbers = #tpu.dot_dimension_numbers<[1], [0], [0], [1], [0, 0, 1, 1], [], []>} : vector<16x16xbf16>, vector<16x16xbf16>, vector<16x16xf32> -> vector<16x16xf32>
    %c1_85 = arith.constant 1 : index
    %c0_86 = arith.constant 0 : index
    %c256_87 = arith.constant 256 : index
    %223 = vector.load %arg3[%c1_85, %c0_86, %c256_87] : memref<3x32x384xbf16, #tpu.memory_space<vmem>>, vector<1x16x32xbf16>
    %224 = vector.shape_cast %223 : vector<1x16x32xbf16> to vector<16x32xbf16>
    %225 = arith.truncf %222 : vector<16x16xf32> to vector<16x16xbf16>
    %cst_88 = arith.constant dense<0.000000e+00> : vector<16x32xf32>
    %226 = tpu.matmul %225, %224, %cst_88 {dimension_numbers = #tpu.dot_dimension_numbers<[1], [0], [0], [1], [0, 0, 1, 1], [], []>} : vector<16x16xbf16>, vector<16x32xbf16>, vector<16x32xf32> -> vector<16x32xf32>
    %227 = arith.addf %202, %226 : vector<16x32xf32>
    %228 = vector.extract_strided_slice %201 {offsets = [0, 16], sizes = [16, 16], strides = [1, 1]} : vector<16x128xf32> to vector<16x16xf32>
    %229 = arith.truncf %228 : vector<16x16xf32> to vector<16x16xbf16>
    %230 = vector.extract_strided_slice %201 {offsets = [0, 48], sizes = [16, 16], strides = [1, 1]} : vector<16x128xf32> to vector<16x16xf32>
    %231 = arith.truncf %230 : vector<16x16xf32> to vector<16x16xbf16>
    %232 = vector.extract_strided_slice %201 {offsets = [0, 80], sizes = [16, 16], strides = [1, 1]} : vector<16x128xf32> to vector<16x16xf32>
    %233 = arith.truncf %232 : vector<16x16xf32> to vector<16x16xbf16>
    "tpu.trace_start"() <{level = 10 : i32, message = "qd,kd->qk"}> : () -> ()
    %cst_89 = arith.constant dense<0.000000e+00> : vector<16x16xf32>
    %234 = tpu.matmul %229, %231, %cst_89 {dimension_numbers = #tpu.dot_dimension_numbers<[1], [1], [0], [0], [0, 0, 1, 0], [], []>} : vector<16x16xbf16>, vector<16x16xbf16>, vector<16x16xf32> -> vector<16x16xf32>
    "tpu.trace_stop"() : () -> ()
    %235 = arith.addf %234, %56 : vector<16x16xf32>
    %cst_90 = arith.constant dense<0xFF800000> : vector<16xf32>
    %236 = vector.multi_reduction <maximumf>, %235, %cst_90 [1] : vector<16x16xf32> to vector<16xf32>
    %237 = vector.shape_cast %236 : vector<16xf32> to vector<16x1xf32>
    %238 = vector.broadcast %237 : vector<16x1xf32> to vector<16x16xf32>
    %239 = arith.subf %235, %238 : vector<16x16xf32>
    %240 = math.exp %239 : vector<16x16xf32>
    %cst_91 = arith.constant dense<0.000000e+00> : vector<16xf32>
    %241 = vector.multi_reduction <add>, %240, %cst_91 [1] : vector<16x16xf32> to vector<16xf32>
    %242 = vector.shape_cast %241 : vector<16xf32> to vector<16x1xf32>
    %243 = tpu.reciprocal %242 {approx = true} : vector<16x1xf32> -> vector<16x1xf32>
    %244 = vector.broadcast %243 : vector<16x1xf32> to vector<16x16xf32>
    %245 = arith.mulf %240, %244 : vector<16x16xf32>
    %246 = arith.truncf %245 : vector<16x16xf32> to vector<16x16xbf16>
    %cst_92 = arith.constant dense<0.000000e+00> : vector<16x16xf32>
    %247 = tpu.matmul %246, %233, %cst_92 {dimension_numbers = #tpu.dot_dimension_numbers<[1], [0], [0], [1], [0, 0, 1, 1], [], []>} : vector<16x16xbf16>, vector<16x16xbf16>, vector<16x16xf32> -> vector<16x16xf32>
    %c1_93 = arith.constant 1 : index
    %c16_94 = arith.constant 16 : index
    %c256_95 = arith.constant 256 : index
    %248 = vector.load %arg3[%c1_93, %c16_94, %c256_95] : memref<3x32x384xbf16, #tpu.memory_space<vmem>>, vector<1x16x32xbf16>
    %249 = vector.shape_cast %248 : vector<1x16x32xbf16> to vector<16x32xbf16>
    %250 = arith.truncf %247 : vector<16x16xf32> to vector<16x16xbf16>
    %cst_96 = arith.constant dense<0.000000e+00> : vector<16x32xf32>
    %251 = tpu.matmul %250, %249, %cst_96 {dimension_numbers = #tpu.dot_dimension_numbers<[1], [0], [0], [1], [0, 0, 1, 1], [], []>} : vector<16x16xbf16>, vector<16x32xbf16>, vector<16x32xf32> -> vector<16x32xf32>
    %252 = arith.addf %227, %251 : vector<16x32xf32>
    %c9 = arith.constant 9 : index
    %c0_97 = arith.constant 0 : index
    %253 = vector.load %arg5[%c9, %c0_97] : memref<22x128xf32, #tpu.memory_space<vmem>>, vector<1x32xf32>
    %254 = vector.broadcast %253 : vector<1x32xf32> to vector<16x32xf32>
    %255 = arith.addf %252, %254 : vector<16x32xf32>
    %256 = arith.addf %194, %255 : vector<16x32xf32>
    %c10 = arith.constant 10 : index
    %c0_98 = arith.constant 0 : index
    %257 = vector.load %arg5[%c10, %c0_98] : memref<22x128xf32, #tpu.memory_space<vmem>>, vector<1x32xf32>
    %c11 = arith.constant 11 : index
    %c0_99 = arith.constant 0 : index
    %258 = vector.load %arg5[%c11, %c0_99] : memref<22x128xf32, #tpu.memory_space<vmem>>, vector<1x32xf32>
    %cst_100 = arith.constant dense<0.000000e+00> : vector<16xf32>
    %259 = vector.multi_reduction <add>, %256, %cst_100 [1] : vector<16x32xf32> to vector<16xf32>
    %260 = vector.shape_cast %259 : vector<16xf32> to vector<16x1xf32>
    %cst_101 = arith.constant 3.200000e+01 : f32
    %261 = vector.broadcast %cst_101 : f32 to vector<16x1xf32>
    %262 = arith.divf %260, %261 : vector<16x1xf32>
    %263 = vector.broadcast %262 : vector<16x1xf32> to vector<16x32xf32>
    %264 = arith.subf %256, %263 : vector<16x32xf32>
    %265 = arith.mulf %264, %264 : vector<16x32xf32>
    %cst_102 = arith.constant dense<0.000000e+00> : vector<16xf32>
    %266 = vector.multi_reduction <add>, %265, %cst_102 [1] : vector<16x32xf32> to vector<16xf32>
    %267 = vector.shape_cast %266 : vector<16xf32> to vector<16x1xf32>
    %cst_103 = arith.constant 3.200000e+01 : f32
    %268 = vector.broadcast %cst_103 : f32 to vector<16x1xf32>
    %269 = arith.divf %267, %268 : vector<16x1xf32>
    %270 = vector.broadcast %262 : vector<16x1xf32> to vector<16x32xf32>
    %271 = arith.subf %256, %270 : vector<16x32xf32>
    %cst_104 = arith.constant 9.99999996E-13 : f32
    %272 = vector.broadcast %cst_104 : f32 to vector<16x1xf32>
    %273 = arith.addf %269, %272 : vector<16x1xf32>
    %274 = math.rsqrt %273 : vector<16x1xf32>
    %275 = vector.broadcast %274 : vector<16x1xf32> to vector<16x32xf32>
    %276 = arith.mulf %271, %275 : vector<16x32xf32>
    %277 = vector.broadcast %257 : vector<1x32xf32> to vector<16x32xf32>
    %278 = arith.mulf %276, %277 : vector<16x32xf32>
    %279 = vector.broadcast %258 : vector<1x32xf32> to vector<16x32xf32>
    %280 = arith.addf %278, %279 : vector<16x32xf32>
    %c1_105 = arith.constant 1 : index
    %c0_106 = arith.constant 0 : index
    %c128_107 = arith.constant 128 : index
    %281 = vector.load %arg3[%c1_105, %c0_106, %c128_107] : memref<3x32x384xbf16, #tpu.memory_space<vmem>>, vector<1x32x128xbf16>
    %282 = vector.shape_cast %281 : vector<1x32x128xbf16> to vector<32x128xbf16>
    %283 = arith.truncf %280 : vector<16x32xf32> to vector<16x32xbf16>
    %cst_108 = arith.constant dense<0.000000e+00> : vector<16x128xf32>
    %284 = tpu.matmul %283, %282, %cst_108 {dimension_numbers = #tpu.dot_dimension_numbers<[1], [0], [0], [1], [0, 0, 1, 1], [], []>} : vector<16x32xbf16>, vector<32x128xbf16>, vector<16x128xf32> -> vector<16x128xf32>
    %c12 = arith.constant 12 : index
    %c0_109 = arith.constant 0 : index
    %285 = vector.load %arg5[%c12, %c0_109] : memref<22x128xf32, #tpu.memory_space<vmem>>, vector<1x128xf32>
    %286 = vector.broadcast %285 : vector<1x128xf32> to vector<16x128xf32>
    %287 = arith.addf %284, %286 : vector<16x128xf32>
    %288 = arith.mulf %287, %287 : vector<16x128xf32>
    %289 = arith.mulf %287, %288 : vector<16x128xf32>
    %cst_110 = arith.constant 4.471500e-02 : f32
    %290 = vector.broadcast %cst_110 : f32 to vector<16x128xf32>
    %291 = arith.mulf %290, %289 : vector<16x128xf32>
    %292 = arith.addf %287, %291 : vector<16x128xf32>
    %cst_111 = arith.constant 0.797884583 : f32
    %293 = vector.broadcast %cst_111 : f32 to vector<16x128xf32>
    %294 = arith.mulf %293, %292 : vector<16x128xf32>
    %295 = math.tanh %294 : vector<16x128xf32>
    %cst_112 = arith.constant 1.000000e+00 : f32
    %296 = vector.broadcast %cst_112 : f32 to vector<16x128xf32>
    %297 = arith.addf %296, %295 : vector<16x128xf32>
    %cst_113 = arith.constant 5.000000e-01 : f32
    %298 = vector.broadcast %cst_113 : f32 to vector<16x128xf32>
    %299 = arith.mulf %298, %297 : vector<16x128xf32>
    %300 = arith.mulf %287, %299 : vector<16x128xf32>
    %c1_114 = arith.constant 1 : index
    %c0_115 = arith.constant 0 : index
    %c0_116 = arith.constant 0 : index
    %301 = vector.load %arg4[%c1_114, %c0_115, %c0_116] : memref<2x128x32xbf16, #tpu.memory_space<vmem>>, vector<1x128x32xbf16>
    %302 = vector.shape_cast %301 : vector<1x128x32xbf16> to vector<128x32xbf16>
    %303 = arith.truncf %300 : vector<16x128xf32> to vector<16x128xbf16>
    %cst_117 = arith.constant dense<0.000000e+00> : vector<16x32xf32>
    %304 = tpu.matmul %303, %302, %cst_117 {dimension_numbers = #tpu.dot_dimension_numbers<[1], [0], [0], [1], [0, 0, 1, 1], [], []>} : vector<16x128xbf16>, vector<128x32xbf16>, vector<16x32xf32> -> vector<16x32xf32>
    %c13 = arith.constant 13 : index
    %c0_118 = arith.constant 0 : index
    %305 = vector.load %arg5[%c13, %c0_118] : memref<22x128xf32, #tpu.memory_space<vmem>>, vector<1x32xf32>
    %306 = vector.broadcast %305 : vector<1x32xf32> to vector<16x32xf32>
    %307 = arith.addf %304, %306 : vector<16x32xf32>
    %308 = arith.addf %280, %307 : vector<16x32xf32>
    %c14 = arith.constant 14 : index
    %c0_119 = arith.constant 0 : index
    %309 = vector.load %arg5[%c14, %c0_119] : memref<22x128xf32, #tpu.memory_space<vmem>>, vector<1x32xf32>
    %c15 = arith.constant 15 : index
    %c0_120 = arith.constant 0 : index
    %310 = vector.load %arg5[%c15, %c0_120] : memref<22x128xf32, #tpu.memory_space<vmem>>, vector<1x32xf32>
    %cst_121 = arith.constant dense<0.000000e+00> : vector<16xf32>
    %311 = vector.multi_reduction <add>, %308, %cst_121 [1] : vector<16x32xf32> to vector<16xf32>
    %312 = vector.shape_cast %311 : vector<16xf32> to vector<16x1xf32>
    %cst_122 = arith.constant 3.200000e+01 : f32
    %313 = vector.broadcast %cst_122 : f32 to vector<16x1xf32>
    %314 = arith.divf %312, %313 : vector<16x1xf32>
    %315 = vector.broadcast %314 : vector<16x1xf32> to vector<16x32xf32>
    %316 = arith.subf %308, %315 : vector<16x32xf32>
    %317 = arith.mulf %316, %316 : vector<16x32xf32>
    %cst_123 = arith.constant dense<0.000000e+00> : vector<16xf32>
    %318 = vector.multi_reduction <add>, %317, %cst_123 [1] : vector<16x32xf32> to vector<16xf32>
    %319 = vector.shape_cast %318 : vector<16xf32> to vector<16x1xf32>
    %cst_124 = arith.constant 3.200000e+01 : f32
    %320 = vector.broadcast %cst_124 : f32 to vector<16x1xf32>
    %321 = arith.divf %319, %320 : vector<16x1xf32>
    %322 = vector.broadcast %314 : vector<16x1xf32> to vector<16x32xf32>
    %323 = arith.subf %308, %322 : vector<16x32xf32>
    %cst_125 = arith.constant 9.99999996E-13 : f32
    %324 = vector.broadcast %cst_125 : f32 to vector<16x1xf32>
    %325 = arith.addf %321, %324 : vector<16x1xf32>
    %326 = math.rsqrt %325 : vector<16x1xf32>
    %327 = vector.broadcast %326 : vector<16x1xf32> to vector<16x32xf32>
    %328 = arith.mulf %323, %327 : vector<16x32xf32>
    %329 = vector.broadcast %309 : vector<1x32xf32> to vector<16x32xf32>
    %330 = arith.mulf %328, %329 : vector<16x32xf32>
    %331 = vector.broadcast %310 : vector<1x32xf32> to vector<16x32xf32>
    %332 = arith.addf %330, %331 : vector<16x32xf32>
    %333 = vector.extract_strided_slice %332 {offsets = [0, 0], sizes = [1, 32], strides = [1, 1]} : vector<16x32xf32> to vector<1x32xf32>
    %334 = vector.extract_strided_slice %332 {offsets = [8, 0], sizes = [1, 32], strides = [1, 1]} : vector<16x32xf32> to vector<1x32xf32>
    %335 = tpu.concatenate %333, %334 in 0 : vector<1x32xf32>, vector<1x32xf32> -> vector<2x32xf32>
    %c2_126 = arith.constant 2 : index
    %c0_127 = arith.constant 0 : index
    %c256_128 = arith.constant 256 : index
    %336 = vector.load %arg3[%c2_126, %c0_127, %c256_128] : memref<3x32x384xbf16, #tpu.memory_space<vmem>>, vector<1x32x32xbf16>
    %337 = vector.shape_cast %336 : vector<1x32x32xbf16> to vector<32x32xbf16>
    %338 = arith.truncf %335 : vector<2x32xf32> to vector<2x32xbf16>
    %cst_129 = arith.constant dense<0.000000e+00> : vector<2x32xf32>
    %339 = tpu.matmul %338, %337, %cst_129 {dimension_numbers = #tpu.dot_dimension_numbers<[1], [0], [0], [1], [0, 0, 1, 1], [], []>} : vector<2x32xbf16>, vector<32x32xbf16>, vector<2x32xf32> -> vector<2x32xf32>
    %c18 = arith.constant 18 : index
    %c0_130 = arith.constant 0 : index
    %340 = vector.load %arg5[%c18, %c0_130] : memref<22x128xf32, #tpu.memory_space<vmem>>, vector<1x32xf32>
    %341 = vector.broadcast %340 : vector<1x32xf32> to vector<2x32xf32>
    %342 = arith.addf %339, %341 : vector<2x32xf32>
    %343 = math.tanh %342 : vector<2x32xf32>
    %c2_131 = arith.constant 2 : index
    %c0_132 = arith.constant 0 : index
    %c0_133 = arith.constant 0 : index
    %344 = vector.load %arg3[%c2_131, %c0_132, %c0_133] : memref<3x32x384xbf16, #tpu.memory_space<vmem>>, vector<1x32x128xbf16>
    %345 = vector.shape_cast %344 : vector<1x32x128xbf16> to vector<32x128xbf16>
    %346 = arith.truncf %343 : vector<2x32xf32> to vector<2x32xbf16>
    %cst_134 = arith.constant dense<0.000000e+00> : vector<2x128xf32>
    %347 = tpu.matmul %346, %345, %cst_134 {dimension_numbers = #tpu.dot_dimension_numbers<[1], [0], [0], [1], [0, 0, 1, 1], [], []>} : vector<2x32xbf16>, vector<32x128xbf16>, vector<2x128xf32> -> vector<2x128xf32>
    %c19 = arith.constant 19 : index
    %c0_135 = arith.constant 0 : index
    %348 = vector.load %arg5[%c19, %c0_135] : memref<22x128xf32, #tpu.memory_space<vmem>>, vector<1x128xf32>
    %349 = vector.broadcast %348 : vector<1x128xf32> to vector<2x128xf32>
    %350 = arith.addf %347, %349 : vector<2x128xf32>
    %c0_136 = arith.constant 0 : index
    %c0_137 = arith.constant 0 : index
    %351 = vector.load %arg6[%c0_136, %c0_137] : memref<2x128xf32, #tpu.memory_space<vmem>>, vector<2x128xf32>
    tpu.vector_store %arg6[%c0_136, %c0_137], %350 {strides = array<i32>} : memref<2x128xf32, #tpu.memory_space<vmem>>, vector<2x128xf32>,
    return
  }
}

</mosaic_0001>

<llo_original>
// kernel: mul.8
$region0: #{mul.8}
  %s0 = inlined_call_operand.vmem [shape: f32[2,8], index: 0, kind: input, shape index: {}]
  %s1 = inlined_call_operand.vmem [shape: f32[16], index: 1, kind: output, shape index: {}]
  $region1: #{mul.8} parent=0
    #allocation0 [shape = 'u8[4096]{0}', space=vmem, size = 0x1000, scoped, tag = 'scoped mem for output reshape']
    #allocation1 [shape = 'u8[4096]{0}', space=vmem, size = 0x1000, scoped, tag = 'scoped mem for input reshape']
    %s3 = sshllo.u32 0, 2
    %v4 = vld [vmem:[%s0] sm:%s3]
    %5 = vst [vmem:[#allocation1] sm:%s3] %v4
    %v6 = vld [vmem:[#allocation1] sm:$0x1]
    %vm7 = vcmask 64512
    %8 = vst.msk [vmem:[#allocation0] sm:$0x1] %vm7, %v6
    %s9 = scalar_lea.vmem [#allocation1], 1
    %v10 = vld [vmem:[%s9] sm:$0x1]
    %11 = vrot.lane.b32.xlu0 %v10, 8
    %v12 = vpop.permute.xlu0 %11
    %vm13 = vcmask 130112
    %14 = vst.msk [vmem:[#allocation0] sm:$0x1] %vm13, %v12
    %s16 = sshllo.u32 0, 1
    %v18 = vld [vmem:[#allocation0] sm:%s16]
    %s19 = sshllo.u32 0, 1
    %20 = vst [vmem:[%s1] sm:%s19] %v18

// kernel: _lambda_.1
$region0: #{_lambda_.1}
  #allocation0 [shape = 'u32[]', space=smem, size = 0x4, offset = 0x4, fixed_abs, tag = 'smem constant byte address 0x4 - core index']
  #allocation1 [shape = 'u32[144,128]{1,0:T(1,128)}', space=vmem, size = 0x12000, scoped, tag = 'internal scratch']
  %s0 = inlined_call_operand.vmem [shape: s32[16,3], index: 0, kind: input, shape index: {}]
  %s1 = inlined_call_operand.vmem [shape: f32[16,16], index: 1, kind: input, shape index: {}]
  %s2 = inlined_call_operand.vmem [shape: bf16[192,32], index: 2, kind: input, shape index: {}]
  %s3 = inlined_call_operand.vmem [shape: bf16[3,32,384], index: 3, kind: input, shape index: {}]
  %s4 = inlined_call_operand.vmem [shape: bf16[2,128,32], index: 4, kind: input, shape index: {}]
  %s5 = inlined_call_operand.vmem [shape: f32[22,128], index: 5, kind: input, shape index: {}]
  %s6 = inlined_call_operand.hbm [shape: f32[2,128], index: 6, kind: output, shape index: {}]
  %s7 = sld [smem:[#allocation0]]
  $region34: #{_lambda_.1} parent=0
    _
  %s9 = ssub.s32 1, %s7
  %s10 = scalar_select 0, %s9, %s7
  $region1: #{_lambda_.1} parent=0
    #allocation2 [shape = 'u8[1024]{0}', space=vmem, size = 0x400, scoped, tag = 'output window, operand 0, single buffered']
    #allocation3 [shape = 's32[1]{0}', space=sflag, size = 0x4, scoped, tag = 'scoped memory for _lambda_.1']
    %11 = vsyncpa [#allocation3], 0
    // Predicated region
    $region2: #{_lambda_.1} parent=1 // pred_check
      _
    $region3: #{_lambda_.1} parent=1 // pred_check_branch
      %13 = sbr.rel (0) target = $region5
    $region4: #{_lambda_.1} parent=1 // pred_region
      _
    $region5: #{_lambda_.1} parent=1 // pred_fallthru
      _
    // Predicated region
    $region6: #{_lambda_.1} parent=1 // pred_check
      _
    $region7: #{_lambda_.1} parent=1 // pred_check_branch
      %15 = sbr.rel (0) target = $region9
    $region8: #{_lambda_.1} parent=1 // pred_region
      _
    $region9: #{_lambda_.1} parent=1 // pred_fallthru
      _
    // Predicated region
    $region10: #{_lambda_.1} parent=1 // pred_check
      _
    $region11: #{_lambda_.1} parent=1 // pred_check_branch
      %17 = sbr.rel (0) target = $region13
    $region12: #{_lambda_.1} parent=1 // pred_region
      _
    $region13: #{_lambda_.1} parent=1 // pred_fallthru
      _
    // Predicated region
    $region14: #{_lambda_.1} parent=1 // pred_check
      _
    $region15: #{_lambda_.1} parent=1 // pred_check_branch
      %19 = sbr.rel (0) target = $region17
    $region16: #{_lambda_.1} parent=1 // pred_region
      _
    $region17: #{_lambda_.1} parent=1 // pred_fallthru
      _
    // Predicated region
    $region18: #{_lambda_.1} parent=1 // pred_check
      _
    $region19: #{_lambda_.1} parent=1 // pred_check_branch
      %21 = sbr.rel (0) target = $region21
    $region20: #{_lambda_.1} parent=1 // pred_region
      _
    $region21: #{_lambda_.1} parent=1 // pred_fallthru
      _
    // Predicated region
    $region22: #{_lambda_.1} parent=1 // pred_check
      _
    $region23: #{_lambda_.1} parent=1 // pred_check_branch
      %23 = sbr.rel (0) target = $region25
    $region24: #{_lambda_.1} parent=1 // pred_region
      _
    $region25: #{_lambda_.1} parent=1 // pred_fallthru
      _
    %v25 = vld [vmem:[%s0] sm:$0xff]
    %v26 = vld [vmem:[%s0 + $0x8] sm:$0xff]
    %v27 = vcvt.s32.f32 %v25
    %v28 = vcvt.s32.f32 %v26
    %v29 = vlaneseq
    %v30 = vand.u32 %v29, 127
    %31 = vset.pattern.permute.xlu0 0
    %32 = vperm.xlu0 %31, %v25
    %v33 = vpop.permute.xlu0 %32
    %34 = vset.pattern.permute.xlu0 0
    %35 = vperm.xlu0 %34, %v26
    %v36 = vpop.permute.xlu0 %35
    %vm37 = vcmp.eq.s32.totalorder %v33, %v30
    %vm38 = vcmp.eq.s32.totalorder %v36, %v30
    %v39 = vsel %vm37, 1.0, 0.0
    %v40 = vsel %vm38, 1.0, 0.0
    %v41 = vpack.c.bf16 %v40, %v39
    %42 = vset.pattern.permute.xlu0 2
    %43 = vperm.xlu0 %42, %v25
    %v44 = vpop.permute.xlu0 %43
    %45 = vset.pattern.permute.xlu0 2
    %46 = vperm.xlu0 %45, %v26
    %v47 = vpop.permute.xlu0 %46
    %vm48 = vcmp.eq.s32.totalorder %v44, %v30
    %vm49 = vcmp.eq.s32.totalorder %v47, %v30
    %v50 = vsel %vm48, 1.0, 0.0
    %v51 = vsel %vm49, 1.0, 0.0
    %v52 = vpack.c.bf16 %v51, %v50
    %v53 = vld [vmem:[%s2] sm:$0xf]
    %v54 = vld [vmem:[%s2 + $0x4] sm:$0xf]
    %v55 = vld [vmem:[%s2 + $0x8] sm:$0xf]
    %v56 = vld [vmem:[%s2 + $0xc] sm:$0xf]
    %v57 = vld [vmem:[%s2 + $0x10] sm:$0xf]
    %v58 = vld [vmem:[%s2 + $0x14] sm:$0xf]
    %v59 = vld [vmem:[%s2 + $0x18] sm:$0xf]
    %v60 = vld [vmem:[%s2 + $0x1c] sm:$0xf]
    %v61 = vld [vmem:[%s2 + $0x20] sm:$0xf]
    %v62 = vld [vmem:[%s2 + $0x24] sm:$0xf]
    %v63 = vld [vmem:[%s2 + $0x28] sm:$0xf]
    %v64 = vld [vmem:[%s2 + $0x2c] sm:$0xf]
    %v65 = vld [vmem:[%s2 + $0x30] sm:$0xf]
    %v66 = vld [vmem:[%s2 + $0x34] sm:$0xf]
    %v67 = vld [vmem:[%s2 + $0x38] sm:$0xf]
    %v68 = vld [vmem:[%s2 + $0x3c] sm:$0xf]
    %v69 = vld [vmem:[%s2 + $0x40] sm:$0xf]
    %v70 = vld [vmem:[%s2 + $0x44] sm:$0xf]
    %v71 = vld [vmem:[%s2 + $0x48] sm:$0xf]
    %v72 = vld [vmem:[%s2 + $0x4c] sm:$0xf]
    %v73 = vld [vmem:[%s2 + $0x50] sm:$0xf]
    %v74 = vld [vmem:[%s2 + $0x54] sm:$0xf]
    %v75 = vld [vmem:[%s2 + $0x58] sm:$0xf]
    %v76 = vld [vmem:[%s2 + $0x5c] sm:$0xf]
    %v85 = vunpack.c.l.b16 %v69
    %v86 = vunpack.c.l.b16 %v70
    %v87 = vunpack.c.l.b16 %v71
    %v88 = vunpack.c.l.b16 %v72
    %v89 = vunpack.c.l.b16 %v73
    %v90 = vunpack.c.l.b16 %v74
    %v91 = vunpack.c.l.b16 %v75
    %v92 = vunpack.c.l.b16 %v76
    %v93 = vpack.c.b16 %v86, %v85
    %v94 = vpack.c.b16 %v88, %v87
    %v95 = vpack.c.b16 %v90, %v89
    %v96 = vpack.c.b16 %v92, %v91
    %vm101 = vcmask 523264
    %v103 = vsel %vm101, %v52, 0
    %105 = vmatprep.subr.bf16.mxu0 0
    %106 = vmatpush1.bf16.msra.mxu0 %v93
    %107 = vmatprep.subr.bf16.mxu0 0
    %108 = vmatpush1.bf16.msra.mxu0 %v94
    %109 = vmatprep.subr.bf16.mxu0 0
    %110 = vmatpush1.bf16.msra.mxu0 %v95
    %111 = vmatprep.subr.bf16.mxu0 0
    %112 = vmatpush1.bf16.msra.mxu0 %v96
    %113 = vmatprep.subr.bf16.mxu0 0
    %114 = vmatpush1.bf16.msra.mxu0 0
    %115 = vmatprep.subr.bf16.mxu0 0
    %116 = vmatpush1.bf16.msra.mxu0 0
    %117 = vmatprep.subr.bf16.mxu0 0
    %118 = vmatpush1.bf16.msra.mxu0 0
    %119 = vmatprep.subr.bf16.mxu0 0
    %120 = vmatpush1.bf16.msra.mxu0 0
    %121 = vmatprep.subr.bf16.mxu0 0
    %122 = vmatpush1.bf16.msra.mxu0 0
    %123 = vmatprep.subr.bf16.mxu0 0
    %124 = vmatpush1.bf16.msra.mxu0 0
    %125 = vmatprep.subr.bf16.mxu0 0
    %126 = vmatpush1.bf16.msra.mxu0 0
    %127 = vmatprep.subr.bf16.mxu0 0
    %128 = vmatpush1.bf16.msra.mxu0 0
    %129 = vmatprep.subr.bf16.mxu0 0
    %130 = vmatpush1.bf16.msra.mxu0 0
    %131 = vmatprep.subr.bf16.mxu0 0
    %132 = vmatpush1.bf16.msra.mxu0 0
    %133 = vmatprep.subr.bf16.mxu0 0
    %134 = vmatpush1.bf16.msra.mxu0 0
    %135 = vmatprep.subr.bf16.mxu0 0
    %136 = vmatpush1.bf16.msra.mxu0 0
    %137 = vmatprep.mubr.bf16.mxu0 0
    %138 = vmatmul.mubr.bf16.gmra.mrb[0].mxu0 %v103
    %v139 = vpop.f32.mrb[0].mxu0
    %v140 = vadd.f32 0.0, %v139
    %v141 = vpop.f32.mrb[0].mxu0
    %v142 = vpop.f32.mrb[0].mxu0
    %v143 = vadd.f32 0.0, %v142
    %v144 = vpop.f32.mrb[0].mxu0
    %145 = vdwg.mxu0
    %v162 = vunpack.c.l.b16 %v53
    %v163 = vunpack.c.l.b16 %v54
    %v164 = vunpack.c.l.b16 %v55
    %v165 = vunpack.c.l.b16 %v56
    %v166 = vunpack.c.l.b16 %v57
    %v167 = vunpack.c.l.b16 %v58
    %v168 = vunpack.c.l.b16 %v59
    %v169 = vunpack.c.l.b16 %v60
    %v170 = vunpack.c.l.b16 %v61
    %v171 = vunpack.c.l.b16 %v62
    %v172 = vunpack.c.l.b16 %v63
    %v173 = vunpack.c.l.b16 %v64
    %v174 = vunpack.c.l.b16 %v65
    %v175 = vunpack.c.l.b16 %v66
    %v176 = vunpack.c.l.b16 %v67
    %v177 = vunpack.c.l.b16 %v68
    %v178 = vpack.c.b16 %v163, %v162
    %v179 = vpack.c.b16 %v165, %v164
    %v180 = vpack.c.b16 %v167, %v166
    %v181 = vpack.c.b16 %v169, %v168
    %v182 = vpack.c.b16 %v171, %v170
    %v183 = vpack.c.b16 %v173, %v172
    %v184 = vpack.c.b16 %v175, %v174
    %v185 = vpack.c.b16 %v177, %v176
    %194 = vmatprep.subr.bf16.mxu0 0
    %195 = vmatpush1.bf16.msra.mxu0 %v178
    %196 = vmatprep.subr.bf16.mxu0 0
    %197 = vmatpush1.bf16.msra.mxu0 %v179
    %198 = vmatprep.subr.bf16.mxu0 0
    %199 = vmatpush1.bf16.msra.mxu0 %v180
    %200 = vmatprep.subr.bf16.mxu0 0
    %201 = vmatpush1.bf16.msra.mxu0 %v181
    %202 = vmatprep.subr.bf16.mxu0 0
    %203 = vmatpush1.bf16.msra.mxu0 %v182
    %204 = vmatprep.subr.bf16.mxu0 0
    %205 = vmatpush1.bf16.msra.mxu0 %v183
    %206 = vmatprep.subr.bf16.mxu0 0
    %207 = vmatpush1.bf16.msra.mxu0 %v184
    %208 = vmatprep.subr.bf16.mxu0 0
    %209 = vmatpush1.bf16.msra.mxu0 %v185
    %210 = vmatprep.subr.bf16.mxu0 0
    %211 = vmatpush1.bf16.msra.mxu0 0
    %212 = vmatprep.subr.bf16.mxu0 0
    %213 = vmatpush1.bf16.msra.mxu0 0
    %214 = vmatprep.subr.bf16.mxu0 0
    %215 = vmatpush1.bf16.msra.mxu0 0
    %216 = vmatprep.subr.bf16.mxu0 0
    %217 = vmatpush1.bf16.msra.mxu0 0
    %218 = vmatprep.subr.bf16.mxu0 0
    %219 = vmatpush1.bf16.msra.mxu0 0
    %220 = vmatprep.subr.bf16.mxu0 0
    %221 = vmatpush1.bf16.msra.mxu0 0
    %222 = vmatprep.subr.bf16.mxu0 0
    %223 = vmatpush1.bf16.msra.mxu0 0
    %224 = vmatprep.subr.bf16.mxu0 0
    %225 = vmatpush1.bf16.msra.mxu0 0
    %226 = vmatprep.mubr.bf16.mxu0 0
    %227 = vmatmul.mubr.bf16.gmra.mrb[0].mxu0 %v41
    %v228 = vpop.f32.mrb[0].mxu0
    %v229 = vadd.f32 %v140, %v228
    %v230 = vpop.f32.mrb[0].mxu0
    %v231 = vpop.f32.mrb[0].mxu0
    %v232 = vadd.f32 %v143, %v231
    %v233 = vpop.f32.mrb[0].mxu0
    %234 = vdwg.mxu0
    %v235 = vld [vmem:[%s5 + $0x14] sm:$0x1]
    %v236 = vld [vmem:[%s5 + $0x15] sm:$0x1]
    %v237 = vlaneseq
    %v238 = vshrl.u32 %v237, 7
    %v239 = vsub.s32 0, %v238
    %v240 = vrot.slane %v235, %v239
    %v241 = vadd.f32 %v229, %v240
    %v242 = vadd.f32 %v232, %v240
    %v243 = vsub.f32 %v236, %v235
    %245 = vset.pattern.permute.xlu0 1
    %246 = vperm.xlu0 %245, %v27
    %v247 = vpop.permute.xlu0 %246
    %250 = vset.pattern.permute.xlu0 1
    %251 = vperm.xlu0 %250, %v28
    %v252 = vpop.permute.xlu0 %251
    %v254 = vlaneseq
    %v255 = vshrl.u32 %v254, 7
    %v256 = vsub.s32 0, %v255
    %v257 = vrot.slane %v243, %v256
    %v258 = vmul.f32 %v247, %v257
    %v259 = vmul.f32 %v252, %v257
    %v260 = vadd.f32 %v241, %v258
    %v261 = vadd.f32 %v242, %v259
    %v262 = vld [vmem:[%s5 + $0x10] sm:$0x1]
    %v263 = vld [vmem:[%s5 + $0x11] sm:$0x1]
    %vm264 = vcmask 261120
    %v265 = vsel %vm264, %v260, 0.0
    %266 = vadd.xlane.f32.xlu0 %v265
    %v267 = vpop.xlane.xlu0 %266
    %v268 = vsel %vm264, %v261, 0.0
    %269 = vadd.xlane.f32.xlu0 %v268
    %v270 = vpop.xlane.xlu0 %269
    %v271 = vrcp.pop 32.0
    %v272 = vmul.f32 %v267, %v271
    %v273 = vmul.f32 %v270, %v271
    %v274 = vsub.f32 %v260, %v272
    %v275 = vsub.f32 %v261, %v273
    %v276 = vmul.f32 %v274, %v274
    %v277 = vmul.f32 %v275, %v275
    %v278 = vsel %vm264, %v276, 0.0
    %279 = vadd.xlane.f32.xlu0 %v278
    %v280 = vpop.xlane.xlu0 %279
    %v281 = vsel %vm264, %v277, 0.0
    %282 = vadd.xlane.f32.xlu0 %v281
    %v283 = vpop.xlane.xlu0 %282
    %v284 = vmul.f32 %v280, %v271
    %v285 = vmul.f32 %v283, %v271
    %v286 = vadd.f32 %v284, 1e-12
    %v287 = vadd.f32 %v285, 1e-12
    %v288 = vrsqrt.pop %v286
    %v289 = vrsqrt.pop %v287
    %v290 = vmul.f32 %v274, %v288
    %v291 = vmul.f32 %v275, %v289
    %v292 = vlaneseq
    %v293 = vshrl.u32 %v292, 7
    %v294 = vsub.s32 0, %v293
    %v295 = vrot.slane %v262, %v294
    %v296 = vmul.f32 %v290, %v295
    %v297 = vmul.f32 %v291, %v295
    %v298 = vlaneseq
    %v299 = vshrl.u32 %v298, 7
    %v300 = vsub.s32 0, %v299
    %v301 = vrot.slane %v263, %v300
    %v302 = vadd.f32 %v296, %v301
    %v303 = vadd.f32 %v297, %v301
    %v304 = vld [vmem:[%s1] sm:$0xff]
    %v305 = vld [vmem:[%s1 + $0x8] sm:$0xff]
    %v306 = vld [vmem:[%s3] sm:$0xf]
    %v307 = vld [vmem:[%s3 + $0xc] sm:$0xf]
    %v308 = vld [vmem:[%s3 + $0x18] sm:$0xf]
    %v309 = vld [vmem:[%s3 + $0x24] sm:$0xf]
    %v310 = vpack.c.bf16 %v303, %v302
    %v311 = vld [vmem:[%s5] sm:$0x1]
    %v312 = vlaneseq
    %v313 = vshrl.u32 %v312, 7
    %v314 = vsub.s32 0, %v313
    %v315 = vrot.slane %v311, %v314
    %v320 = vunpack.c.l.b16 %v306
    %v321 = vunpack.c.l.b16 %v307
    %v322 = vunpack.c.l.b16 %v308
    %v323 = vunpack.c.l.b16 %v309
    %v324 = vpack.c.b16 %v321, %v320
    %v325 = vpack.c.b16 %v323, %v322
    %v329 = vsel %vm264, %v310, 0
    %331 = vmatprep.subr.bf16.mxu0 0
    %332 = vmatpush1.bf16.msra.mxu0 %v324
    %333 = vmatprep.subr.bf16.mxu0 0
    %334 = vmatpush1.bf16.msra.mxu0 %v325
    %335 = vmatprep.subr.bf16.mxu0 0
    %336 = vmatpush1.bf16.msra.mxu0 0
    %337 = vmatprep.subr.bf16.mxu0 0
    %338 = vmatpush1.bf16.msra.mxu0 0
    %339 = vmatprep.subr.bf16.mxu0 0
    %340 = vmatpush1.bf16.msra.mxu0 0
    %341 = vmatprep.subr.bf16.mxu0 0
    %342 = vmatpush1.bf16.msra.mxu0 0
    %343 = vmatprep.subr.bf16.mxu0 0
    %344 = vmatpush1.bf16.msra.mxu0 0
    %345 = vmatprep.subr.bf16.mxu0 0
    %346 = vmatpush1.bf16.msra.mxu0 0
    %347 = vmatprep.subr.bf16.mxu0 0
    %348 = vmatpush1.bf16.msra.mxu0 0
    %349 = vmatprep.subr.bf16.mxu0 0
    %350 = vmatpush1.bf16.msra.mxu0 0
    %351 = vmatprep.subr.bf16.mxu0 0
    %352 = vmatpush1.bf16.msra.mxu0 0
    %353 = vmatprep.subr.bf16.mxu0 0
    %354 = vmatpush1.bf16.msra.mxu0 0
    %355 = vmatprep.subr.bf16.mxu0 0
    %356 = vmatpush1.bf16.msra.mxu0 0
    %357 = vmatprep.subr.bf16.mxu0 0
    %358 = vmatpush1.bf16.msra.mxu0 0
    %359 = vmatprep.subr.bf16.mxu0 0
    %360 = vmatpush1.bf16.msra.mxu0 0
    %361 = vmatprep.subr.bf16.mxu0 0
    %362 = vmatpush1.bf16.msra.mxu0 0
    %363 = vmatprep.mubr.bf16.mxu0 0
    %364 = vmatmul.mubr.bf16.gmra.mrb[0].mxu0 %v329
    %v365 = vpop.f32.mrb[0].mxu0
    %v366 = vadd.f32 %v315, %v365
    %v367 = vpop.f32.mrb[0].mxu0
    %v368 = vpop.f32.mrb[0].mxu0
    %v369 = vadd.f32 %v315, %v368
    %v370 = vpop.f32.mrb[0].mxu0
    %371 = vdwg.mxu0
    %v372 = vpack.c.bf16 %v369, %v366
    %374 = vrot.lane.b32.xlu0 %v372, 96
    %v375 = vpop.permute.xlu0 %374
    %vm376 = vcmask 130048
    %v378 = vsel %vm376, %v372, 0
    %v381 = vsel %vm376, %v375, 0
    %383 = vmatprep.subr.bf16.mxu0 0
    %384 = vmatpush1.bf16.xpose.msra.mxu0 %v381
    %385 = vmatprep.subr.bf16.mxu0 0
    %386 = vmatpush1.bf16.xpose.msra.mxu0 0
    %387 = vmatprep.subr.bf16.mxu0 0
    %388 = vmatpush1.bf16.xpose.msra.mxu0 0
    %389 = vmatprep.subr.bf16.mxu0 0
    %390 = vmatpush1.bf16.xpose.msra.mxu0 0
    %391 = vmatprep.subr.bf16.mxu0 0
    %392 = vmatpush1.bf16.xpose.msra.mxu0 0
    %393 = vmatprep.subr.bf16.mxu0 0
    %394 = vmatpush1.bf16.xpose.msra.mxu0 0
    %395 = vmatprep.subr.bf16.mxu0 0
    %396 = vmatpush1.bf16.xpose.msra.mxu0 0
    %397 = vmatprep.subr.bf16.mxu0 0
    %398 = vmatpush1.bf16.xpose.msra.mxu0 0
    %399 = vmatprep.subr.bf16.mxu0 0
    %400 = vmatpush1.bf16.xpose.msra.mxu0 0
    %401 = vmatprep.subr.bf16.mxu0 0
    %402 = vmatpush1.bf16.xpose.msra.mxu0 0
    %403 = vmatprep.subr.bf16.mxu0 0
    %404 = vmatpush1.bf16.xpose.msra.mxu0 0
    %405 = vmatprep.subr.bf16.mxu0 0
    %406 = vmatpush1.bf16.xpose.msra.mxu0 0
    %407 = vmatprep.subr.bf16.mxu0 0
    %408 = vmatpush1.bf16.xpose.msra.mxu0 0
    %409 = vmatprep.subr.bf16.mxu0 0
    %410 = vmatpush1.bf16.xpose.msra.mxu0 0
    %411 = vmatprep.subr.bf16.mxu0 0
    %412 = vmatpush1.bf16.xpose.msra.mxu0 0
    %413 = vmatprep.subr.bf16.mxu0 0
    %414 = vmatpush1.bf16.xpose.msra.mxu0 0
    %415 = vmatprep.mubr.bf16.mxu0 0
    %416 = vmatmul.mubr.bf16.gmra.mrb[0].mxu0 %v378
    %v417 = vpop.f32.mrb[0].mxu0
    %v418 = vadd.f32 %v304, %v417
    %v419 = vpop.f32.mrb[0].mxu0
    %v420 = vpop.f32.mrb[0].mxu0
    %v421 = vadd.f32 %v305, %v420
    %v422 = vpop.f32.mrb[0].mxu0
    %423 = vdwg.mxu0
    %v424 = vsel %vm376, %v418, -inf
    %425 = vmax.xlane.f32.xlu0 %v424
    %v426 = vpop.xlane.xlu0 %425
    %v427 = vsel %vm376, %v421, -inf
    %428 = vmax.xlane.f32.xlu0 %v427
    %v429 = vpop.xlane.xlu0 %428
    %v430 = vsub.f32 %v418, %v426
    %v431 = vsub.f32 %v421, %v429
    %v432 = vmul.f32 %v430, 1.442695
    %v433 = vpow.pop %v432
    %v434 = vmul.f32 %v431, 1.442695
    %v435 = vpow.pop %v434
    %v436 = vsel %vm376, %v433, 0.0
    %437 = vadd.xlane.f32.xlu0 %v436
    %v438 = vpop.xlane.xlu0 %437
    %v439 = vsel %vm376, %v435, 0.0
    %440 = vadd.xlane.f32.xlu0 %v439
    %v441 = vpop.xlane.xlu0 %440
    %v442 = vrcp.pop %v438
    %v443 = vrcp.pop %v441
    %v444 = vmul.f32 %v433, %v442
    %v445 = vmul.f32 %v435, %v443
    %v446 = vpack.c.bf16 %v445, %v444
    %447 = vrot.lane.b32.xlu0 %v372, 64
    %v448 = vpop.permute.xlu0 %447
    %v451 = vsel %vm376, %v446, 0
    %453 = vmatprep.subr.bf16.mxu0 0
    %454 = vmatpush1.bf16.msra.mxu0 %v448
    %455 = vmatprep.subr.bf16.mxu0 0
    %456 = vmatpush1.bf16.msra.mxu0 0
    %457 = vmatprep.subr.bf16.mxu0 0
    %458 = vmatpush1.bf16.msra.mxu0 0
    %459 = vmatprep.subr.bf16.mxu0 0
    %460 = vmatpush1.bf16.msra.mxu0 0
    %461 = vmatprep.subr.bf16.mxu0 0
    %462 = vmatpush1.bf16.msra.mxu0 0
    %463 = vmatprep.subr.bf16.mxu0 0
    %464 = vmatpush1.bf16.msra.mxu0 0
    %465 = vmatprep.subr.bf16.mxu0 0
    %466 = vmatpush1.bf16.msra.mxu0 0
    %467 = vmatprep.subr.bf16.mxu0 0
    %468 = vmatpush1.bf16.msra.mxu0 0
    %469 = vmatprep.subr.bf16.mxu0 0
    %470 = vmatpush1.bf16.msra.mxu0 0
    %471 = vmatprep.subr.bf16.mxu0 0
    %472 = vmatpush1.bf16.msra.mxu0 0
    %473 = vmatprep.subr.bf16.mxu0 0
    %474 = vmatpush1.bf16.msra.mxu0 0
    %475 = vmatprep.subr.bf16.mxu0 0
    %476 = vmatpush1.bf16.msra.mxu0 0
    %477 = vmatprep.subr.bf16.mxu0 0
    %478 = vmatpush1.bf16.msra.mxu0 0
    %479 = vmatprep.subr.bf16.mxu0 0
    %480 = vmatpush1.bf16.msra.mxu0 0
    %481 = vmatprep.subr.bf16.mxu0 0
    %482 = vmatpush1.bf16.msra.mxu0 0
    %483 = vmatprep.subr.bf16.mxu0 0
    %484 = vmatpush1.bf16.msra.mxu0 0
    %485 = vmatprep.mubr.bf16.mxu0 0
    %486 = vmatmul.mubr.bf16.gmra.mrb[0].mxu0 %v451
    %v487 = vpop.f32.mrb[0].mxu0
    %v488 = vadd.f32 0.0, %v487
    %v489 = vpop.f32.mrb[0].mxu0
    %v490 = vpop.f32.mrb[0].mxu0
    %v491 = vadd.f32 0.0, %v490
    %v492 = vpop.f32.mrb[0].mxu0
    %493 = vdwg.mxu0
    %v494 = vld [vmem:[%s3 + $0x8] sm:$0xf]
    %v495 = vld [vmem:[%s3 + $0x14] sm:$0xf]
    %v496 = vpack.c.bf16 %v491, %v488
    %497 = vrot.lane.b32.xlu0 %v372, 112
    %v498 = vpop.permute.xlu0 %497
    %499 = vrot.lane.b32.xlu0 %v372, 80
    %v500 = vpop.permute.xlu0 %499
    %v502 = vsel %vm376, %v498, 0
    %v505 = vsel %vm376, %v500, 0
    %507 = vmatprep.subr.bf16.mxu0 0
    %508 = vmatpush1.bf16.xpose.msra.mxu0 %v505
    %509 = vmatprep.subr.bf16.mxu0 0
    %510 = vmatpush1.bf16.xpose.msra.mxu0 0
    %511 = vmatprep.subr.bf16.mxu0 0
    %512 = vmatpush1.bf16.xpose.msra.mxu0 0
    %513 = vmatprep.subr.bf16.mxu0 0
    %514 = vmatpush1.bf16.xpose.msra.mxu0 0
    %515 = vmatprep.subr.bf16.mxu0 0
    %516 = vmatpush1.bf16.xpose.msra.mxu0 0
    %517 = vmatprep.subr.bf16.mxu0 0
    %518 = vmatpush1.bf16.xpose.msra.mxu0 0
    %519 = vmatprep.subr.bf16.mxu0 0
    %520 = vmatpush1.bf16.xpose.msra.mxu0 0
    %521 = vmatprep.subr.bf16.mxu0 0
    %522 = vmatpush1.bf16.xpose.msra.mxu0 0
    %523 = vmatprep.subr.bf16.mxu0 0
    %524 = vmatpush1.bf16.xpose.msra.mxu0 0
    %525 = vmatprep.subr.bf16.mxu0 0
    %526 = vmatpush1.bf16.xpose.msra.mxu0 0
    %527 = vmatprep.subr.bf16.mxu0 0
    %528 = vmatpush1.bf16.xpose.msra.mxu0 0
    %529 = vmatprep.subr.bf16.mxu0 0
    %530 = vmatpush1.bf16.xpose.msra.mxu0 0
    %531 = vmatprep.subr.bf16.mxu0 0
    %532 = vmatpush1.bf16.xpose.msra.mxu0 0
    %533 = vmatprep.subr.bf16.mxu0 0
    %534 = vmatpush1.bf16.xpose.msra.mxu0 0
    %535 = vmatprep.subr.bf16.mxu0 0
    %536 = vmatpush1.bf16.xpose.msra.mxu0 0
    %537 = vmatprep.subr.bf16.mxu0 0
    %538 = vmatpush1.bf16.xpose.msra.mxu0 0
    %539 = vmatprep.mubr.bf16.mxu0 0
    %540 = vmatmul.mubr.bf16.gmra.mrb[0].mxu0 %v502
    %v541 = vpop.f32.mrb[0].mxu0
    %v542 = vadd.f32 %v304, %v541
    %v543 = vpop.f32.mrb[0].mxu0
    %v544 = vpop.f32.mrb[0].mxu0
    %v545 = vadd.f32 %v305, %v544
    %v546 = vpop.f32.mrb[0].mxu0
    %547 = vdwg.mxu0
    %v548 = vsel %vm376, %v542, -inf
    %549 = vmax.xlane.f32.xlu0 %v548
    %v550 = vpop.xlane.xlu0 %549
    %v551 = vsel %vm376, %v545, -inf
    %552 = vmax.xlane.f32.xlu0 %v551
    %v553 = vpop.xlane.xlu0 %552
    %v554 = vsub.f32 %v542, %v550
    %v555 = vsub.f32 %v545, %v553
    %v556 = vmul.f32 %v554, 1.442695
    %v557 = vpow.pop %v556
    %v558 = vmul.f32 %v555, 1.442695
    %v559 = vpow.pop %v558
    %v560 = vsel %vm376, %v557, 0.0
    %561 = vadd.xlane.f32.xlu0 %v560
    %v562 = vpop.xlane.xlu0 %561
    %v563 = vsel %vm376, %v559, 0.0
    %564 = vadd.xlane.f32.xlu0 %v563
    %v565 = vpop.xlane.xlu0 %564
    %v566 = vrcp.pop %v562
    %v567 = vrcp.pop %v565
    %v568 = vmul.f32 %v557, %v566
    %v569 = vmul.f32 %v559, %v567
    %v570 = vpack.c.bf16 %v569, %v568
    %571 = vrot.lane.b32.xlu0 %v372, 48
    %v572 = vpop.permute.xlu0 %571
    %v575 = vsel %vm376, %v570, 0
    %577 = vmatprep.subr.bf16.mxu0 0
    %578 = vmatpush1.bf16.msra.mxu0 %v572
    %579 = vmatprep.subr.bf16.mxu0 0
    %580 = vmatpush1.bf16.msra.mxu0 0
    %581 = vmatprep.subr.bf16.mxu0 0
    %582 = vmatpush1.bf16.msra.mxu0 0
    %583 = vmatprep.subr.bf16.mxu0 0
    %584 = vmatpush1.bf16.msra.mxu0 0
    %585 = vmatprep.subr.bf16.mxu0 0
    %586 = vmatpush1.bf16.msra.mxu0 0
    %587 = vmatprep.subr.bf16.mxu0 0
    %588 = vmatpush1.bf16.msra.mxu0 0
    %589 = vmatprep.subr.bf16.mxu0 0
    %590 = vmatpush1.bf16.msra.mxu0 0
    %591 = vmatprep.subr.bf16.mxu0 0
    %592 = vmatpush1.bf16.msra.mxu0 0
    %593 = vmatprep.subr.bf16.mxu0 0
    %594 = vmatpush1.bf16.msra.mxu0 0
    %595 = vmatprep.subr.bf16.mxu0 0
    %596 = vmatpush1.bf16.msra.mxu0 0
    %597 = vmatprep.subr.bf16.mxu0 0
    %598 = vmatpush1.bf16.msra.mxu0 0
    %599 = vmatprep.subr.bf16.mxu0 0
    %600 = vmatpush1.bf16.msra.mxu0 0
    %601 = vmatprep.subr.bf16.mxu0 0
    %602 = vmatpush1.bf16.msra.mxu0 0
    %603 = vmatprep.subr.bf16.mxu0 0
    %604 = vmatpush1.bf16.msra.mxu0 0
    %605 = vmatprep.subr.bf16.mxu0 0
    %606 = vmatpush1.bf16.msra.mxu0 0
    %607 = vmatprep.subr.bf16.mxu0 0
    %608 = vmatpush1.bf16.msra.mxu0 0
    %609 = vmatprep.mubr.bf16.mxu0 0
    %610 = vmatmul.mubr.bf16.gmra.mrb[0].mxu0 %v575
    %v611 = vpop.f32.mrb[0].mxu0
    %v612 = vadd.f32 0.0, %v611
    %v613 = vpop.f32.mrb[0].mxu0
    %v614 = vpop.f32.mrb[0].mxu0
    %v615 = vadd.f32 0.0, %v614
    %v616 = vpop.f32.mrb[0].mxu0
    %617 = vdwg.mxu0
    %v618 = vld [vmem:[%s3 + $0x20] sm:$0xf]
    %v619 = vld [vmem:[%s3 + $0x2c] sm:$0xf]
    %v620 = vpack.c.bf16 %v615, %v612
    %v623 = vunpack.c.l.b16 %v618
    %v624 = vunpack.c.l.b16 %v619
    %v625 = vpack.c.b16 %v624, %v623
    %v628 = vsel %vm376, %v620, 0
    %630 = vmatprep.subr.bf16.mxu0 0
    %631 = vmatpush1.bf16.msra.mxu0 %v625
    %632 = vmatprep.subr.bf16.mxu0 0
    %633 = vmatpush1.bf16.msra.mxu0 0
    %634 = vmatprep.subr.bf16.mxu0 0
    %635 = vmatpush1.bf16.msra.mxu0 0
    %636 = vmatprep.subr.bf16.mxu0 0
    %637 = vmatpush1.bf16.msra.mxu0 0
    %638 = vmatprep.subr.bf16.mxu0 0
    %639 = vmatpush1.bf16.msra.mxu0 0
    %640 = vmatprep.subr.bf16.mxu0 0
    %641 = vmatpush1.bf16.msra.mxu0 0
    %642 = vmatprep.subr.bf16.mxu0 0
    %643 = vmatpush1.bf16.msra.mxu0 0
    %644 = vmatprep.subr.bf16.mxu0 0
    %645 = vmatpush1.bf16.msra.mxu0 0
    %646 = vmatprep.subr.bf16.mxu0 0
    %647 = vmatpush1.bf16.msra.mxu0 0
    %648 = vmatprep.subr.bf16.mxu0 0
    %649 = vmatpush1.bf16.msra.mxu0 0
    %650 = vmatprep.subr.bf16.mxu0 0
    %651 = vmatpush1.bf16.msra.mxu0 0
    %652 = vmatprep.subr.bf16.mxu0 0
    %653 = vmatpush1.bf16.msra.mxu0 0
    %654 = vmatprep.subr.bf16.mxu0 0
    %655 = vmatpush1.bf16.msra.mxu0 0
    %656 = vmatprep.subr.bf16.mxu0 0
    %657 = vmatpush1.bf16.msra.mxu0 0
    %658 = vmatprep.subr.bf16.mxu0 0
    %659 = vmatpush1.bf16.msra.mxu0 0
    %660 = vmatprep.subr.bf16.mxu0 0
    %661 = vmatpush1.bf16.msra.mxu0 0
    %662 = vmatprep.mubr.bf16.mxu0 0
    %663 = vmatmul.mubr.bf16.gmra.mrb[0].mxu0 %v628
    %v664 = vpop.f32.mrb[0].mxu0
    %v665 = vadd.f32 0.0, %v664
    %v666 = vpop.f32.mrb[0].mxu0
    %v667 = vpop.f32.mrb[0].mxu0
    %v668 = vadd.f32 0.0, %v667
    %v669 = vpop.f32.mrb[0].mxu0
    %670 = vdwg.mxu0
    %v673 = vunpack.c.l.b16 %v494
    %v674 = vunpack.c.l.b16 %v495
    %v675 = vpack.c.b16 %v674, %v673
    %v678 = vsel %vm376, %v496, 0
    %680 = vmatprep.subr.bf16.mxu0 0
    %681 = vmatpush1.bf16.msra.mxu0 %v675
    %682 = vmatprep.subr.bf16.mxu0 0
    %683 = vmatpush1.bf16.msra.mxu0 0
    %684 = vmatprep.subr.bf16.mxu0 0
    %685 = vmatpush1.bf16.msra.mxu0 0
    %686 = vmatprep.subr.bf16.mxu0 0
    %687 = vmatpush1.bf16.msra.mxu0 0
    %688 = vmatprep.subr.bf16.mxu0 0
    %689 = vmatpush1.bf16.msra.mxu0 0
    %690 = vmatprep.subr.bf16.mxu0 0
    %691 = vmatpush1.bf16.msra.mxu0 0
    %692 = vmatprep.subr.bf16.mxu0 0
    %693 = vmatpush1.bf16.msra.mxu0 0
    %694 = vmatprep.subr.bf16.mxu0 0
    %695 = vmatpush1.bf16.msra.mxu0 0
    %696 = vmatprep.subr.bf16.mxu0 0
    %697 = vmatpush1.bf16.msra.mxu0 0
    %698 = vmatprep.subr.bf16.mxu0 0
    %699 = vmatpush1.bf16.msra.mxu0 0
    %700 = vmatprep.subr.bf16.mxu0 0
    %701 = vmatpush1.bf16.msra.mxu0 0
    %702 = vmatprep.subr.bf16.mxu0 0
    %703 = vmatpush1.bf16.msra.mxu0 0
    %704 = vmatprep.subr.bf16.mxu0 0
    %705 = vmatpush1.bf16.msra.mxu0 0
    %706 = vmatprep.subr.bf16.mxu0 0
    %707 = vmatpush1.bf16.msra.mxu0 0
    %708 = vmatprep.subr.bf16.mxu0 0
    %709 = vmatpush1.bf16.msra.mxu0 0
    %710 = vmatprep.subr.bf16.mxu0 0
    %711 = vmatpush1.bf16.msra.mxu0 0
    %712 = vmatprep.mubr.bf16.mxu0 0
    %713 = vmatmul.mubr.bf16.gmra.mrb[0].mxu0 %v678
    %v714 = vpop.f32.mrb[0].mxu0
    %v715 = vadd.f32 %v665, %v714
    %v716 = vpop.f32.mrb[0].mxu0
    %v717 = vpop.f32.mrb[0].mxu0
    %v718 = vadd.f32 %v668, %v717
    %v719 = vpop.f32.mrb[0].mxu0
    %720 = vdwg.mxu0
    %v721 = vld [vmem:[%s5 + $0x1] sm:$0x1]
    %v722 = vlaneseq
    %v723 = vshrl.u32 %v722, 7
    %v724 = vsub.s32 0, %v723
    %v725 = vrot.slane %v721, %v724
    %v726 = vadd.f32 %v715, %v725
    %v727 = vadd.f32 %v718, %v725
    %v728 = vadd.f32 %v302, %v726
    %v729 = vadd.f32 %v303, %v727
    %v730 = vld [vmem:[%s5 + $0x2] sm:$0x1]
    %v731 = vld [vmem:[%s5 + $0x3] sm:$0x1]
    %v732 = vsel %vm264, %v728, 0.0
    %733 = vadd.xlane.f32.xlu0 %v732
    %v734 = vpop.xlane.xlu0 %733
    %v735 = vsel %vm264, %v729, 0.0
    %736 = vadd.xlane.f32.xlu0 %v735
    %v737 = vpop.xlane.xlu0 %736
    %v738 = vmul.f32 %v734, %v271
    %v739 = vmul.f32 %v737, %v271
    %v740 = vsub.f32 %v728, %v738
    %v741 = vsub.f32 %v729, %v739
    %v742 = vmul.f32 %v740, %v740
    %v743 = vmul.f32 %v741, %v741
    %v744 = vsel %vm264, %v742, 0.0
    %745 = vadd.xlane.f32.xlu0 %v744
    %v746 = vpop.xlane.xlu0 %745
    %v747 = vsel %vm264, %v743, 0.0
    %748 = vadd.xlane.f32.xlu0 %v747
    %v749 = vpop.xlane.xlu0 %748
    %v750 = vmul.f32 %v746, %v271
    %v751 = vmul.f32 %v749, %v271
    %v752 = vadd.f32 %v750, 1e-12
    %v753 = vadd.f32 %v751, 1e-12
    %v754 = vrsqrt.pop %v752
    %v755 = vrsqrt.pop %v753
    %v756 = vmul.f32 %v740, %v754
    %v757 = vmul.f32 %v741, %v755
    %v758 = vlaneseq
    %v759 = vshrl.u32 %v758, 7
    %v760 = vsub.s32 0, %v759
    %v761 = vrot.slane %v730, %v760
    %v762 = vmul.f32 %v756, %v761
    %v763 = vmul.f32 %v757, %v761
    %v764 = vlaneseq
    %v765 = vshrl.u32 %v764, 7
    %v766 = vsub.s32 0, %v765
    %v767 = vrot.slane %v731, %v766
    %v768 = vadd.f32 %v762, %v767
    %v769 = vadd.f32 %v763, %v767
    %v770 = vld [vmem:[%s3 + $0x4] sm:$0xf]
    %v771 = vld [vmem:[%s3 + $0x10] sm:$0xf]
    %v772 = vld [vmem:[%s3 + $0x1c] sm:$0xf]
    %v773 = vld [vmem:[%s3 + $0x28] sm:$0xf]
    %v774 = vpack.c.bf16 %v769, %v768
    %v775 = vld [vmem:[%s5 + $0x4] sm:$0x1]
    %v776 = vlaneseq
    %v777 = vshrl.u32 %v776, 7
    %v778 = vsub.s32 0, %v777
    %v779 = vrot.slane %v775, %v778
    %v784 = vunpack.c.l.b16 %v770
    %v785 = vunpack.c.l.b16 %v771
    %v786 = vunpack.c.l.b16 %v772
    %v787 = vunpack.c.l.b16 %v773
    %v788 = vpack.c.b16 %v785, %v784
    %v789 = vpack.c.b16 %v787, %v786
    %v793 = vsel %vm264, %v774, 0
    %795 = vmatprep.subr.bf16.mxu0 0
    %796 = vmatpush1.bf16.msra.mxu0 %v788
    %797 = vmatprep.subr.bf16.mxu0 0
    %798 = vmatpush1.bf16.msra.mxu0 %v789
    %799 = vmatprep.subr.bf16.mxu0 0
    %800 = vmatpush1.bf16.msra.mxu0 0
    %801 = vmatprep.subr.bf16.mxu0 0
    %802 = vmatpush1.bf16.msra.mxu0 0
    %803 = vmatprep.subr.bf16.mxu0 0
    %804 = vmatpush1.bf16.msra.mxu0 0
    %805 = vmatprep.subr.bf16.mxu0 0
    %806 = vmatpush1.bf16.msra.mxu0 0
    %807 = vmatprep.subr.bf16.mxu0 0
    %808 = vmatpush1.bf16.msra.mxu0 0
    %809 = vmatprep.subr.bf16.mxu0 0
    %810 = vmatpush1.bf16.msra.mxu0 0
    %811 = vmatprep.subr.bf16.mxu0 0
    %812 = vmatpush1.bf16.msra.mxu0 0
    %813 = vmatprep.subr.bf16.mxu0 0
    %814 = vmatpush1.bf16.msra.mxu0 0
    %815 = vmatprep.subr.bf16.mxu0 0
    %816 = vmatpush1.bf16.msra.mxu0 0
    %817 = vmatprep.subr.bf16.mxu0 0
    %818 = vmatpush1.bf16.msra.mxu0 0
    %819 = vmatprep.subr.bf16.mxu0 0
    %820 = vmatpush1.bf16.msra.mxu0 0
    %821 = vmatprep.subr.bf16.mxu0 0
    %822 = vmatpush1.bf16.msra.mxu0 0
    %823 = vmatprep.subr.bf16.mxu0 0
    %824 = vmatpush1.bf16.msra.mxu0 0
    %825 = vmatprep.subr.bf16.mxu0 0
    %826 = vmatpush1.bf16.msra.mxu0 0
    %827 = vmatprep.mubr.bf16.mxu0 0
    %828 = vmatmul.mubr.bf16.gmra.mrb[0].mxu0 %v793
    %v829 = vpop.f32.mrb[0].mxu0
    %v830 = vadd.f32 %v779, %v829
    %v831 = vpop.f32.mrb[0].mxu0
    %v832 = vpop.f32.mrb[0].mxu0
    %v833 = vadd.f32 %v779, %v832
    %v834 = vpop.f32.mrb[0].mxu0
    %835 = vdwg.mxu0
    %v836 = vmul.f32 %v830, %v830
    %v837 = vmul.f32 %v833, %v833
    %v838 = vmul.f32 %v830, %v836
    %v839 = vmul.f32 %v833, %v837
    %v840 = vmul.f32 %v838, 0.044715
    %v841 = vmul.f32 %v839, 0.044715
    %v842 = vadd.f32 %v830, %v840
    %v843 = vadd.f32 %v833, %v841
    %v844 = vmul.f32 %v842, 0.7978846
    %v845 = vmul.f32 %v843, 0.7978846
    %v846 = vtanh.pop %v844
    %v847 = vtanh.pop %v845
    %v848 = vadd.f32 %v846, 1.0
    %v849 = vadd.f32 %v847, 1.0
    %v850 = vmul.f32 %v848, 0.5
    %v851 = vmul.f32 %v849, 0.5
    %v852 = vmul.f32 %v830, %v850
    %v853 = vmul.f32 %v833, %v851
    %v854 = vld [vmem:[%s4] sm:$0xf]
    %v855 = vld [vmem:[%s4 + $0x4] sm:$0xf]
    %v856 = vld [vmem:[%s4 + $0x8] sm:$0xf]
    %v857 = vld [vmem:[%s4 + $0xc] sm:$0xf]
    %v858 = vld [vmem:[%s4 + $0x10] sm:$0xf]
    %v859 = vld [vmem:[%s4 + $0x14] sm:$0xf]
    %v860 = vld [vmem:[%s4 + $0x18] sm:$0xf]
    %v861 = vld [vmem:[%s4 + $0x1c] sm:$0xf]
    %v862 = vld [vmem:[%s4 + $0x20] sm:$0xf]
    %v863 = vld [vmem:[%s4 + $0x24] sm:$0xf]
    %v864 = vld [vmem:[%s4 + $0x28] sm:$0xf]
    %v865 = vld [vmem:[%s4 + $0x2c] sm:$0xf]
    %v866 = vld [vmem:[%s4 + $0x30] sm:$0xf]
    %v867 = vld [vmem:[%s4 + $0x34] sm:$0xf]
    %v868 = vld [vmem:[%s4 + $0x38] sm:$0xf]
    %v869 = vld [vmem:[%s4 + $0x3c] sm:$0xf]
    %v870 = vpack.c.bf16 %v853, %v852
    %v871 = vld [vmem:[%s5 + $0x5] sm:$0x1]
    %v872 = vlaneseq
    %v873 = vshrl.u32 %v872, 7
    %v874 = vsub.s32 0, %v873
    %v875 = vrot.slane %v871, %v874
    %v892 = vunpack.c.l.b16 %v854
    %v893 = vunpack.c.l.b16 %v855
    %v894 = vunpack.c.l.b16 %v856
    %v895 = vunpack.c.l.b16 %v857
    %v896 = vunpack.c.l.b16 %v858
    %v897 = vunpack.c.l.b16 %v859
    %v898 = vunpack.c.l.b16 %v860
    %v899 = vunpack.c.l.b16 %v861
    %v900 = vunpack.c.l.b16 %v862
    %v901 = vunpack.c.l.b16 %v863
    %v902 = vunpack.c.l.b16 %v864
    %v903 = vunpack.c.l.b16 %v865
    %v904 = vunpack.c.l.b16 %v866
    %v905 = vunpack.c.l.b16 %v867
    %v906 = vunpack.c.l.b16 %v868
    %v907 = vunpack.c.l.b16 %v869
    %v908 = vpack.c.b16 %v893, %v892
    %v909 = vpack.c.b16 %v895, %v894
    %v910 = vpack.c.b16 %v897, %v896
    %v911 = vpack.c.b16 %v899, %v898
    %v912 = vpack.c.b16 %v901, %v900
    %v913 = vpack.c.b16 %v903, %v902
    %v914 = vpack.c.b16 %v905, %v904
    %v915 = vpack.c.b16 %v907, %v906
    %924 = vmatprep.subr.bf16.mxu0 0
    %925 = vmatpush1.bf16.msra.mxu0 %v908
    %926 = vmatprep.subr.bf16.mxu0 0
    %927 = vmatpush1.bf16.msra.mxu0 %v909
    %928 = vmatprep.subr.bf16.mxu0 0
    %929 = vmatpush1.bf16.msra.mxu0 %v910
    %930 = vmatprep.subr.bf16.mxu0 0
    %931 = vmatpush1.bf16.msra.mxu0 %v911
    %932 = vmatprep.subr.bf16.mxu0 0
    %933 = vmatpush1.bf16.msra.mxu0 %v912
    %934 = vmatprep.subr.bf16.mxu0 0
    %935 = vmatpush1.bf16.msra.mxu0 %v913
    %936 = vmatprep.subr.bf16.mxu0 0
    %937 = vmatpush1.bf16.msra.mxu0 %v914
    %938 = vmatprep.subr.bf16.mxu0 0
    %939 = vmatpush1.bf16.msra.mxu0 %v915
    %940 = vmatprep.subr.bf16.mxu0 0
    %941 = vmatpush1.bf16.msra.mxu0 0
    %942 = vmatprep.subr.bf16.mxu0 0
    %943 = vmatpush1.bf16.msra.mxu0 0
    %944 = vmatprep.subr.bf16.mxu0 0
    %945 = vmatpush1.bf16.msra.mxu0 0
    %946 = vmatprep.subr.bf16.mxu0 0
    %947 = vmatpush1.bf16.msra.mxu0 0
    %948 = vmatprep.subr.bf16.mxu0 0
    %949 = vmatpush1.bf16.msra.mxu0 0
    %950 = vmatprep.subr.bf16.mxu0 0
    %951 = vmatpush1.bf16.msra.mxu0 0
    %952 = vmatprep.subr.bf16.mxu0 0
    %953 = vmatpush1.bf16.msra.mxu0 0
    %954 = vmatprep.subr.bf16.mxu0 0
    %955 = vmatpush1.bf16.msra.mxu0 0
    %956 = vmatprep.mubr.bf16.mxu0 0
    %957 = vmatmul.mubr.bf16.gmra.mrb[0].mxu0 %v870
    %v958 = vpop.f32.mrb[0].mxu0
    %v959 = vadd.f32 %v875, %v958
    %v960 = vpop.f32.mrb[0].mxu0
    %v961 = vpop.f32.mrb[0].mxu0
    %v962 = vadd.f32 %v875, %v961
    %v963 = vpop.f32.mrb[0].mxu0
    %964 = vdwg.mxu0
    %v965 = vadd.f32 %v768, %v959
    %v966 = vadd.f32 %v769, %v962
    %v967 = vld [vmem:[%s5 + $0x6] sm:$0x1]
    %v968 = vld [vmem:[%s5 + $0x7] sm:$0x1]
    %v969 = vsel %vm264, %v965, 0.0
    %970 = vadd.xlane.f32.xlu0 %v969
    %v971 = vpop.xlane.xlu0 %970
    %v972 = vsel %vm264, %v966, 0.0
    %973 = vadd.xlane.f32.xlu0 %v972
    %v974 = vpop.xlane.xlu0 %973
    %v975 = vmul.f32 %v971, %v271
    %v976 = vmul.f32 %v974, %v271
    %v977 = vsub.f32 %v965, %v975
    %v978 = vsub.f32 %v966, %v976
    %v979 = vmul.f32 %v977, %v977
    %v980 = vmul.f32 %v978, %v978
    %v981 = vsel %vm264, %v979, 0.0
    %982 = vadd.xlane.f32.xlu0 %v981
    %v983 = vpop.xlane.xlu0 %982
    %v984 = vsel %vm264, %v980, 0.0
    %985 = vadd.xlane.f32.xlu0 %v984
    %v986 = vpop.xlane.xlu0 %985
    %v987 = vmul.f32 %v983, %v271
    %v988 = vmul.f32 %v986, %v271
    %v989 = vadd.f32 %v987, 1e-12
    %v990 = vadd.f32 %v988, 1e-12
    %v991 = vrsqrt.pop %v989
    %v992 = vrsqrt.pop %v990
    %v993 = vmul.f32 %v977, %v991
    %v994 = vmul.f32 %v978, %v992
    %v995 = vlaneseq
    %v996 = vshrl.u32 %v995, 7
    %v997 = vsub.s32 0, %v996
    %v998 = vrot.slane %v967, %v997
    %v999 = vmul.f32 %v993, %v998
    %v1000 = vmul.f32 %v994, %v998
    %v1001 = vlaneseq
    %v1002 = vshrl.u32 %v1001, 7
    %v1003 = vsub.s32 0, %v1002
    %v1004 = vrot.slane %v968, %v1003
    %v1005 = vadd.f32 %v999, %v1004
    %v1006 = vadd.f32 %v1000, %v1004
    %s1007 = scalar_lea.vmem %s3, 48
    %v1008 = vld [vmem:[%s1007] sm:$0xf]
    %v1009 = vld [vmem:[%s1007 + $0xc] sm:$0xf]
    %v1010 = vld [vmem:[%s1007 + $0x18] sm:$0xf]
    %v1011 = vld [vmem:[%s1007 + $0x24] sm:$0xf]
    %v1012 = vpack.c.bf16 %v1006, %v1005
    %v1013 = vld [vmem:[%s5 + $0x8] sm:$0x1]
    %v1014 = vlaneseq
    %v1015 = vshrl.u32 %v1014, 7
    %v1016 = vsub.s32 0, %v1015
    %v1017 = vrot.slane %v1013, %v1016
    %v1022 = vunpack.c.l.b16 %v1008
    %v1023 = vunpack.c.l.b16 %v1009
    %v1024 = vunpack.c.l.b16 %v1010
    %v1025 = vunpack.c.l.b16 %v1011
    %v1026 = vpack.c.b16 %v1023, %v1022
    %v1027 = vpack.c.b16 %v1025, %v1024
    %v1031 = vsel %vm264, %v1012, 0
    %1033 = vmatprep.subr.bf16.mxu0 0
    %1034 = vmatpush1.bf16.msra.mxu0 %v1026
    %1035 = vmatprep.subr.bf16.mxu0 0
    %1036 = vmatpush1.bf16.msra.mxu0 %v1027
    %1037 = vmatprep.subr.bf16.mxu0 0
    %1038 = vmatpush1.bf16.msra.mxu0 0
    %1039 = vmatprep.subr.bf16.mxu0 0
    %1040 = vmatpush1.bf16.msra.mxu0 0
    %1041 = vmatprep.subr.bf16.mxu0 0
    %1042 = vmatpush1.bf16.msra.mxu0 0
    %1043 = vmatprep.subr.bf16.mxu0 0
    %1044 = vmatpush1.bf16.msra.mxu0 0
    %1045 = vmatprep.subr.bf16.mxu0 0
    %1046 = vmatpush1.bf16.msra.mxu0 0
    %1047 = vmatprep.subr.bf16.mxu0 0
    %1048 = vmatpush1.bf16.msra.mxu0 0
    %1049 = vmatprep.subr.bf16.mxu0 0
    %1050 = vmatpush1.bf16.msra.mxu0 0
    %1051 = vmatprep.subr.bf16.mxu0 0
    %1052 = vmatpush1.bf16.msra.mxu0 0
    %1053 = vmatprep.subr.bf16.mxu0 0
    %1054 = vmatpush1.bf16.msra.mxu0 0
    %1055 = vmatprep.subr.bf16.mxu0 0
    %1056 = vmatpush1.bf16.msra.mxu0 0
    %1057 = vmatprep.subr.bf16.mxu0 0
    %1058 = vmatpush1.bf16.msra.mxu0 0
    %1059 = vmatprep.subr.bf16.mxu0 0
    %1060 = vmatpush1.bf16.msra.mxu0 0
    %1061 = vmatprep.subr.bf16.mxu0 0
    %1062 = vmatpush1.bf16.msra.mxu0 0
    %1063 = vmatprep.subr.bf16.mxu0 0
    %1064 = vmatpush1.bf16.msra.mxu0 0
    %1065 = vmatprep.mubr.bf16.mxu0 0
    %1066 = vmatmul.mubr.bf16.gmra.mrb[0].mxu0 %v1031
    %v1067 = vpop.f32.mrb[0].mxu0
    %v1068 = vadd.f32 %v1017, %v1067
    %v1069 = vpop.f32.mrb[0].mxu0
    %v1070 = vpop.f32.mrb[0].mxu0
    %v1071 = vadd.f32 %v1017, %v1070
    %v1072 = vpop.f32.mrb[0].mxu0
    %1073 = vdwg.mxu0
    %v1074 = vpack.c.bf16 %v1071, %v1068
    %1076 = vrot.lane.b32.xlu0 %v1074, 96
    %v1077 = vpop.permute.xlu0 %1076
    %v1079 = vsel %vm376, %v1074, 0
    %v1082 = vsel %vm376, %v1077, 0
    %1084 = vmatprep.subr.bf16.mxu0 0
    %1085 = vmatpush1.bf16.xpose.msra.mxu0 %v1082
    %1086 = vmatprep.subr.bf16.mxu0 0
    %1087 = vmatpush1.bf16.xpose.msra.mxu0 0
    %1088 = vmatprep.subr.bf16.mxu0 0
    %1089 = vmatpush1.bf16.xpose.msra.mxu0 0
    %1090 = vmatprep.subr.bf16.mxu0 0
    %1091 = vmatpush1.bf16.xpose.msra.mxu0 0
    %1092 = vmatprep.subr.bf16.mxu0 0
    %1093 = vmatpush1.bf16.xpose.msra.mxu0 0
    %1094 = vmatprep.subr.bf16.mxu0 0
    %1095 = vmatpush1.bf16.xpose.msra.mxu0 0
    %1096 = vmatprep.subr.bf16.mxu0 0
    %1097 = vmatpush1.bf16.xpose.msra.mxu0 0
    %1098 = vmatprep.subr.bf16.mxu0 0
    %1099 = vmatpush1.bf16.xpose.msra.mxu0 0
    %1100 = vmatprep.subr.bf16.mxu0 0
    %1101 = vmatpush1.bf16.xpose.msra.mxu0 0
    %1102 = vmatprep.subr.bf16.mxu0 0
    %1103 = vmatpush1.bf16.xpose.msra.mxu0 0
    %1104 = vmatprep.subr.bf16.mxu0 0
    %1105 = vmatpush1.bf16.xpose.msra.mxu0 0
    %1106 = vmatprep.subr.bf16.mxu0 0
    %1107 = vmatpush1.bf16.xpose.msra.mxu0 0
    %1108 = vmatprep.subr.bf16.mxu0 0
    %1109 = vmatpush1.bf16.xpose.msra.mxu0 0
    %1110 = vmatprep.subr.bf16.mxu0 0
    %1111 = vmatpush1.bf16.xpose.msra.mxu0 0
    %1112 = vmatprep.subr.bf16.mxu0 0
    %1113 = vmatpush1.bf16.xpose.msra.mxu0 0
    %1114 = vmatprep.subr.bf16.mxu0 0
    %1115 = vmatpush1.bf16.xpose.msra.mxu0 0
    %1116 = vmatprep.mubr.bf16.mxu0 0
    %1117 = vmatmul.mubr.bf16.gmra.mrb[0].mxu0 %v1079
    %v1118 = vpop.f32.mrb[0].mxu0
    %v1119 = vadd.f32 %v304, %v1118
    %v1120 = vpop.f32.mrb[0].mxu0
    %v1121 = vpop.f32.mrb[0].mxu0
    %v1122 = vadd.f32 %v305, %v1121
    %v1123 = vpop.f32.mrb[0].mxu0
    %1124 = vdwg.mxu0
    %v1125 = vsel %vm376, %v1119, -inf
    %1126 = vmax.xlane.f32.xlu0 %v1125
    %v1127 = vpop.xlane.xlu0 %1126
    %v1128 = vsel %vm376, %v1122, -inf
    %1129 = vmax.xlane.f32.xlu0 %v1128
    %v1130 = vpop.xlane.xlu0 %1129
    %v1131 = vsub.f32 %v1119, %v1127
    %v1132 = vsub.f32 %v1122, %v1130
    %v1133 = vmul.f32 %v1131, 1.442695
    %v1134 = vpow.pop %v1133
    %v1135 = vmul.f32 %v1132, 1.442695
    %v1136 = vpow.pop %v1135
    %v1137 = vsel %vm376, %v1134, 0.0
    %1138 = vadd.xlane.f32.xlu0 %v1137
    %v1139 = vpop.xlane.xlu0 %1138
    %v1140 = vsel %vm376, %v1136, 0.0
    %1141 = vadd.xlane.f32.xlu0 %v1140
    %v1142 = vpop.xlane.xlu0 %1141
    %v1143 = vrcp.pop %v1139
    %v1144 = vrcp.pop %v1142
    %v1145 = vmul.f32 %v1134, %v1143
    %v1146 = vmul.f32 %v1136, %v1144
    %v1147 = vpack.c.bf16 %v1146, %v1145
    %1148 = vrot.lane.b32.xlu0 %v1074, 64
    %v1149 = vpop.permute.xlu0 %1148
    %v1152 = vsel %vm376, %v1147, 0
    %1154 = vmatprep.subr.bf16.mxu0 0
    %1155 = vmatpush1.bf16.msra.mxu0 %v1149
    %1156 = vmatprep.subr.bf16.mxu0 0
    %1157 = vmatpush1.bf16.msra.mxu0 0
    %1158 = vmatprep.subr.bf16.mxu0 0
    %1159 = vmatpush1.bf16.msra.mxu0 0
    %1160 = vmatprep.subr.bf16.mxu0 0
    %1161 = vmatpush1.bf16.msra.mxu0 0
    %1162 = vmatprep.subr.bf16.mxu0 0
    %1163 = vmatpush1.bf16.msra.mxu0 0
    %1164 = vmatprep.subr.bf16.mxu0 0
    %1165 = vmatpush1.bf16.msra.mxu0 0
    %1166 = vmatprep.subr.bf16.mxu0 0
    %1167 = vmatpush1.bf16.msra.mxu0 0
    %1168 = vmatprep.subr.bf16.mxu0 0
    %1169 = vmatpush1.bf16.msra.mxu0 0
    %1170 = vmatprep.subr.bf16.mxu0 0
    %1171 = vmatpush1.bf16.msra.mxu0 0
    %1172 = vmatprep.subr.bf16.mxu0 0
    %1173 = vmatpush1.bf16.msra.mxu0 0
    %1174 = vmatprep.subr.bf16.mxu0 0
    %1175 = vmatpush1.bf16.msra.mxu0 0
    %1176 = vmatprep.subr.bf16.mxu0 0
    %1177 = vmatpush1.bf16.msra.mxu0 0
    %1178 = vmatprep.subr.bf16.mxu0 0
    %1179 = vmatpush1.bf16.msra.mxu0 0
    %1180 = vmatprep.subr.bf16.mxu0 0
    %1181 = vmatpush1.bf16.msra.mxu0 0
    %1182 = vmatprep.subr.bf16.mxu0 0
    %1183 = vmatpush1.bf16.msra.mxu0 0
    %1184 = vmatprep.subr.bf16.mxu0 0
    %1185 = vmatpush1.bf16.msra.mxu0 0
    %1186 = vmatprep.mubr.bf16.mxu0 0
    %1187 = vmatmul.mubr.bf16.gmra.mrb[0].mxu0 %v1152
    %v1188 = vpop.f32.mrb[0].mxu0
    %v1189 = vadd.f32 0.0, %v1188
    %v1190 = vpop.f32.mrb[0].mxu0
    %v1191 = vpop.f32.mrb[0].mxu0
    %v1192 = vadd.f32 0.0, %v1191
    %v1193 = vpop.f32.mrb[0].mxu0
    %1194 = vdwg.mxu0
    %v1195 = vld [vmem:[%s1007 + $0x8] sm:$0xf]
    %v1196 = vld [vmem:[%s1007 + $0x14] sm:$0xf]
    %v1197 = vpack.c.bf16 %v1192, %v1189
    %1198 = vrot.lane.b32.xlu0 %v1074, 112
    %v1199 = vpop.permute.xlu0 %1198
    %1200 = vrot.lane.b32.xlu0 %v1074, 80
    %v1201 = vpop.permute.xlu0 %1200
    %v1203 = vsel %vm376, %v1199, 0
    %v1206 = vsel %vm376, %v1201, 0
    %1208 = vmatprep.subr.bf16.mxu0 0
    %1209 = vmatpush1.bf16.xpose.msra.mxu0 %v1206
    %1210 = vmatprep.subr.bf16.mxu0 0
    %1211 = vmatpush1.bf16.xpose.msra.mxu0 0
    %1212 = vmatprep.subr.bf16.mxu0 0
    %1213 = vmatpush1.bf16.xpose.msra.mxu0 0
    %1214 = vmatprep.subr.bf16.mxu0 0
    %1215 = vmatpush1.bf16.xpose.msra.mxu0 0
    %1216 = vmatprep.subr.bf16.mxu0 0
    %1217 = vmatpush1.bf16.xpose.msra.mxu0 0
    %1218 = vmatprep.subr.bf16.mxu0 0
    %1219 = vmatpush1.bf16.xpose.msra.mxu0 0
    %1220 = vmatprep.subr.bf16.mxu0 0
    %1221 = vmatpush1.bf16.xpose.msra.mxu0 0
    %1222 = vmatprep.subr.bf16.mxu0 0
    %1223 = vmatpush1.bf16.xpose.msra.mxu0 0
    %1224 = vmatprep.subr.bf16.mxu0 0
    %1225 = vmatpush1.bf16.xpose.msra.mxu0 0
    %1226 = vmatprep.subr.bf16.mxu0 0
    %1227 = vmatpush1.bf16.xpose.msra.mxu0 0
    %1228 = vmatprep.subr.bf16.mxu0 0
    %1229 = vmatpush1.bf16.xpose.msra.mxu0 0
    %1230 = vmatprep.subr.bf16.mxu0 0
    %1231 = vmatpush1.bf16.xpose.msra.mxu0 0
    %1232 = vmatprep.subr.bf16.mxu0 0
    %1233 = vmatpush1.bf16.xpose.msra.mxu0 0
    %1234 = vmatprep.subr.bf16.mxu0 0
    %1235 = vmatpush1.bf16.xpose.msra.mxu0 0
    %1236 = vmatprep.subr.bf16.mxu0 0
    %1237 = vmatpush1.bf16.xpose.msra.mxu0 0
    %1238 = vmatprep.subr.bf16.mxu0 0
    %1239 = vmatpush1.bf16.xpose.msra.mxu0 0
    %1240 = vmatprep.mubr.bf16.mxu0 0
    %1241 = vmatmul.mubr.bf16.gmra.mrb[0].mxu0 %v1203
    %v1242 = vpop.f32.mrb[0].mxu0
    %v1243 = vadd.f32 %v304, %v1242
    %v1244 = vpop.f32.mrb[0].mxu0
    %v1245 = vpop.f32.mrb[0].mxu0
    %v1246 = vadd.f32 %v305, %v1245
    %v1247 = vpop.f32.mrb[0].mxu0
    %1248 = vdwg.mxu0
    %v1249 = vsel %vm376, %v1243, -inf
    %1250 = vmax.xlane.f32.xlu0 %v1249
    %v1251 = vpop.xlane.xlu0 %1250
    %v1252 = vsel %vm376, %v1246, -inf
    %1253 = vmax.xlane.f32.xlu0 %v1252
    %v1254 = vpop.xlane.xlu0 %1253
    %v1255 = vsub.f32 %v1243, %v1251
    %v1256 = vsub.f32 %v1246, %v1254
    %v1257 = vmul.f32 %v1255, 1.442695
    %v1258 = vpow.pop %v1257
    %v1259 = vmul.f32 %v1256, 1.442695
    %v1260 = vpow.pop %v1259
    %v1261 = vsel %vm376, %v1258, 0.0
    %1262 = vadd.xlane.f32.xlu0 %v1261
    %v1263 = vpop.xlane.xlu0 %1262
    %v1264 = vsel %vm376, %v1260, 0.0
    %1265 = vadd.xlane.f32.xlu0 %v1264
    %v1266 = vpop.xlane.xlu0 %1265
    %v1267 = vrcp.pop %v1263
    %v1268 = vrcp.pop %v1266
    %v1269 = vmul.f32 %v1258, %v1267
    %v1270 = vmul.f32 %v1260, %v1268
    %v1271 = vpack.c.bf16 %v1270, %v1269
    %1272 = vrot.lane.b32.xlu0 %v1074, 48
    %v1273 = vpop.permute.xlu0 %1272
    %v1276 = vsel %vm376, %v1271, 0
    %1278 = vmatprep.subr.bf16.mxu0 0
    %1279 = vmatpush1.bf16.msra.mxu0 %v1273
    %1280 = vmatprep.subr.bf16.mxu0 0
    %1281 = vmatpush1.bf16.msra.mxu0 0
    %1282 = vmatprep.subr.bf16.mxu0 0
    %1283 = vmatpush1.bf16.msra.mxu0 0
    %1284 = vmatprep.subr.bf16.mxu0 0
    %1285 = vmatpush1.bf16.msra.mxu0 0
    %1286 = vmatprep.subr.bf16.mxu0 0
    %1287 = vmatpush1.bf16.msra.mxu0 0
    %1288 = vmatprep.subr.bf16.mxu0 0
    %1289 = vmatpush1.bf16.msra.mxu0 0
    %1290 = vmatprep.subr.bf16.mxu0 0
    %1291 = vmatpush1.bf16.msra.mxu0 0
    %1292 = vmatprep.subr.bf16.mxu0 0
    %1293 = vmatpush1.bf16.msra.mxu0 0
    %1294 = vmatprep.subr.bf16.mxu0 0
    %1295 = vmatpush1.bf16.msra.mxu0 0
    %1296 = vmatprep.subr.bf16.mxu0 0
    %1297 = vmatpush1.bf16.msra.mxu0 0
    %1298 = vmatprep.subr.bf16.mxu0 0
    %1299 = vmatpush1.bf16.msra.mxu0 0
    %1300 = vmatprep.subr.bf16.mxu0 0
    %1301 = vmatpush1.bf16.msra.mxu0 0
    %1302 = vmatprep.subr.bf16.mxu0 0
    %1303 = vmatpush1.bf16.msra.mxu0 0
    %1304 = vmatprep.subr.bf16.mxu0 0
    %1305 = vmatpush1.bf16.msra.mxu0 0
    %1306 = vmatprep.subr.bf16.mxu0 0
    %1307 = vmatpush1.bf16.msra.mxu0 0
    %1308 = vmatprep.subr.bf16.mxu0 0
    %1309 = vmatpush1.bf16.msra.mxu0 0
    %1310 = vmatprep.mubr.bf16.mxu0 0
    %1311 = vmatmul.mubr.bf16.gmra.mrb[0].mxu0 %v1276
    %v1312 = vpop.f32.mrb[0].mxu0
    %v1313 = vadd.f32 0.0, %v1312
    %v1314 = vpop.f32.mrb[0].mxu0
    %v1315 = vpop.f32.mrb[0].mxu0
    %v1316 = vadd.f32 0.0, %v1315
    %v1317 = vpop.f32.mrb[0].mxu0
    %1318 = vdwg.mxu0
    %v1319 = vld [vmem:[%s1007 + $0x20] sm:$0xf]
    %v1320 = vld [vmem:[%s1007 + $0x2c] sm:$0xf]
    %v1321 = vpack.c.bf16 %v1316, %v1313
    %v1324 = vunpack.c.l.b16 %v1319
    %v1325 = vunpack.c.l.b16 %v1320
    %v1326 = vpack.c.b16 %v1325, %v1324
    %v1329 = vsel %vm376, %v1321, 0
    %1331 = vmatprep.subr.bf16.mxu0 0
    %1332 = vmatpush1.bf16.msra.mxu0 %v1326
    %1333 = vmatprep.subr.bf16.mxu0 0
    %1334 = vmatpush1.bf16.msra.mxu0 0
    %1335 = vmatprep.subr.bf16.mxu0 0
    %1336 = vmatpush1.bf16.msra.mxu0 0
    %1337 = vmatprep.subr.bf16.mxu0 0
    %1338 = vmatpush1.bf16.msra.mxu0 0
    %1339 = vmatprep.subr.bf16.mxu0 0
    %1340 = vmatpush1.bf16.msra.mxu0 0
    %1341 = vmatprep.subr.bf16.mxu0 0
    %1342 = vmatpush1.bf16.msra.mxu0 0
    %1343 = vmatprep.subr.bf16.mxu0 0
    %1344 = vmatpush1.bf16.msra.mxu0 0
    %1345 = vmatprep.subr.bf16.mxu0 0
    %1346 = vmatpush1.bf16.msra.mxu0 0
    %1347 = vmatprep.subr.bf16.mxu0 0
    %1348 = vmatpush1.bf16.msra.mxu0 0
    %1349 = vmatprep.subr.bf16.mxu0 0
    %1350 = vmatpush1.bf16.msra.mxu0 0
    %1351 = vmatprep.subr.bf16.mxu0 0
    %1352 = vmatpush1.bf16.msra.mxu0 0
    %1353 = vmatprep.subr.bf16.mxu0 0
    %1354 = vmatpush1.bf16.msra.mxu0 0
    %1355 = vmatprep.subr.bf16.mxu0 0
    %1356 = vmatpush1.bf16.msra.mxu0 0
    %1357 = vmatprep.subr.bf16.mxu0 0
    %1358 = vmatpush1.bf16.msra.mxu0 0
    %1359 = vmatprep.subr.bf16.mxu0 0
    %1360 = vmatpush1.bf16.msra.mxu0 0
    %1361 = vmatprep.subr.bf16.mxu0 0
    %1362 = vmatpush1.bf16.msra.mxu0 0
    %1363 = vmatprep.mubr.bf16.mxu0 0
    %1364 = vmatmul.mubr.bf16.gmra.mrb[0].mxu0 %v1329
    %v1365 = vpop.f32.mrb[0].mxu0
    %v1366 = vadd.f32 0.0, %v1365
    %v1367 = vpop.f32.mrb[0].mxu0
    %v1368 = vpop.f32.mrb[0].mxu0
    %v1369 = vadd.f32 0.0, %v1368
    %v1370 = vpop.f32.mrb[0].mxu0
    %1371 = vdwg.mxu0
    %v1374 = vunpack.c.l.b16 %v1195
    %v1375 = vunpack.c.l.b16 %v1196
    %v1376 = vpack.c.b16 %v1375, %v1374
    %v1379 = vsel %vm376, %v1197, 0
    %1381 = vmatprep.subr.bf16.mxu0 0
    %1382 = vmatpush1.bf16.msra.mxu0 %v1376
    %1383 = vmatprep.subr.bf16.mxu0 0
    %1384 = vmatpush1.bf16.msra.mxu0 0
    %1385 = vmatprep.subr.bf16.mxu0 0
    %1386 = vmatpush1.bf16.msra.mxu0 0
    %1387 = vmatprep.subr.bf16.mxu0 0
    %1388 = vmatpush1.bf16.msra.mxu0 0
    %1389 = vmatprep.subr.bf16.mxu0 0
    %1390 = vmatpush1.bf16.msra.mxu0 0
    %1391 = vmatprep.subr.bf16.mxu0 0
    %1392 = vmatpush1.bf16.msra.mxu0 0
    %1393 = vmatprep.subr.bf16.mxu0 0
    %1394 = vmatpush1.bf16.msra.mxu0 0
    %1395 = vmatprep.subr.bf16.mxu0 0
    %1396 = vmatpush1.bf16.msra.mxu0 0
    %1397 = vmatprep.subr.bf16.mxu0 0
    %1398 = vmatpush1.bf16.msra.mxu0 0
    %1399 = vmatprep.subr.bf16.mxu0 0
    %1400 = vmatpush1.bf16.msra.mxu0 0
    %1401 = vmatprep.subr.bf16.mxu0 0
    %1402 = vmatpush1.bf16.msra.mxu0 0
    %1403 = vmatprep.subr.bf16.mxu0 0
    %1404 = vmatpush1.bf16.msra.mxu0 0
    %1405 = vmatprep.subr.bf16.mxu0 0
    %1406 = vmatpush1.bf16.msra.mxu0 0
    %1407 = vmatprep.subr.bf16.mxu0 0
    %1408 = vmatpush1.bf16.msra.mxu0 0
    %1409 = vmatprep.subr.bf16.mxu0 0
    %1410 = vmatpush1.bf16.msra.mxu0 0
    %1411 = vmatprep.subr.bf16.mxu0 0
    %1412 = vmatpush1.bf16.msra.mxu0 0
    %1413 = vmatprep.mubr.bf16.mxu0 0
    %1414 = vmatmul.mubr.bf16.gmra.mrb[0].mxu0 %v1379
    %v1415 = vpop.f32.mrb[0].mxu0
    %v1416 = vadd.f32 %v1366, %v1415
    %v1417 = vpop.f32.mrb[0].mxu0
    %v1418 = vpop.f32.mrb[0].mxu0
    %v1419 = vadd.f32 %v1369, %v1418
    %v1420 = vpop.f32.mrb[0].mxu0
    %1421 = vdwg.mxu0
    %v1422 = vld [vmem:[%s5 + $0x9] sm:$0x1]
    %v1423 = vlaneseq
    %v1424 = vshrl.u32 %v1423, 7
    %v1425 = vsub.s32 0, %v1424
    %v1426 = vrot.slane %v1422, %v1425
    %v1427 = vadd.f32 %v1416, %v1426
    %v1428 = vadd.f32 %v1419, %v1426
    %v1429 = vadd.f32 %v1005, %v1427
    %v1430 = vadd.f32 %v1006, %v1428
    %v1431 = vld [vmem:[%s5 + $0xa] sm:$0x1]
    %v1432 = vld [vmem:[%s5 + $0xb] sm:$0x1]
    %v1433 = vsel %vm264, %v1429, 0.0
    %1434 = vadd.xlane.f32.xlu0 %v1433
    %v1435 = vpop.xlane.xlu0 %1434
    %v1436 = vsel %vm264, %v1430, 0.0
    %1437 = vadd.xlane.f32.xlu0 %v1436
    %v1438 = vpop.xlane.xlu0 %1437
    %v1439 = vmul.f32 %v1435, %v271
    %v1440 = vmul.f32 %v1438, %v271
    %v1441 = vsub.f32 %v1429, %v1439
    %v1442 = vsub.f32 %v1430, %v1440
    %v1443 = vmul.f32 %v1441, %v1441
    %v1444 = vmul.f32 %v1442, %v1442
    %v1445 = vsel %vm264, %v1443, 0.0
    %1446 = vadd.xlane.f32.xlu0 %v1445
    %v1447 = vpop.xlane.xlu0 %1446
    %v1448 = vsel %vm264, %v1444, 0.0
    %1449 = vadd.xlane.f32.xlu0 %v1448
    %v1450 = vpop.xlane.xlu0 %1449
    %v1451 = vmul.f32 %v1447, %v271
    %v1452 = vmul.f32 %v1450, %v271
    %v1453 = vadd.f32 %v1451, 1e-12
    %v1454 = vadd.f32 %v1452, 1e-12
    %v1455 = vrsqrt.pop %v1453
    %v1456 = vrsqrt.pop %v1454
    %v1457 = vmul.f32 %v1441, %v1455
    %v1458 = vmul.f32 %v1442, %v1456
    %v1459 = vlaneseq
    %v1460 = vshrl.u32 %v1459, 7
    %v1461 = vsub.s32 0, %v1460
    %v1462 = vrot.slane %v1431, %v1461
    %v1463 = vmul.f32 %v1457, %v1462
    %v1464 = vmul.f32 %v1458, %v1462
    %v1465 = vlaneseq
    %v1466 = vshrl.u32 %v1465, 7
    %v1467 = vsub.s32 0, %v1466
    %v1468 = vrot.slane %v1432, %v1467
    %v1469 = vadd.f32 %v1463, %v1468
    %v1470 = vadd.f32 %v1464, %v1468
    %v1471 = vld [vmem:[%s1007 + $0x4] sm:$0xf]
    %v1472 = vld [vmem:[%s1007 + $0x10] sm:$0xf]
    %v1473 = vld [vmem:[%s1007 + $0x1c] sm:$0xf]
    %v1474 = vld [vmem:[%s1007 + $0x28] sm:$0xf]
    %v1475 = vpack.c.bf16 %v1470, %v1469
    %v1476 = vld [vmem:[%s5 + $0xc] sm:$0x1]
    %v1477 = vlaneseq
    %v1478 = vshrl.u32 %v1477, 7
    %v1479 = vsub.s32 0, %v1478
    %v1480 = vrot.slane %v1476, %v1479
    %v1485 = vunpack.c.l.b16 %v1471
    %v1486 = vunpack.c.l.b16 %v1472
    %v1487 = vunpack.c.l.b16 %v1473
    %v1488 = vunpack.c.l.b16 %v1474
    %v1489 = vpack.c.b16 %v1486, %v1485
    %v1490 = vpack.c.b16 %v1488, %v1487
    %v1494 = vsel %vm264, %v1475, 0
    %1496 = vmatprep.subr.bf16.mxu0 0
    %1497 = vmatpush1.bf16.msra.mxu0 %v1489
    %1498 = vmatprep.subr.bf16.mxu0 0
    %1499 = vmatpush1.bf16.msra.mxu0 %v1490
    %1500 = vmatprep.subr.bf16.mxu0 0
    %1501 = vmatpush1.bf16.msra.mxu0 0
    %1502 = vmatprep.subr.bf16.mxu0 0
    %1503 = vmatpush1.bf16.msra.mxu0 0
    %1504 = vmatprep.subr.bf16.mxu0 0
    %1505 = vmatpush1.bf16.msra.mxu0 0
    %1506 = vmatprep.subr.bf16.mxu0 0
    %1507 = vmatpush1.bf16.msra.mxu0 0
    %1508 = vmatprep.subr.bf16.mxu0 0
    %1509 = vmatpush1.bf16.msra.mxu0 0
    %1510 = vmatprep.subr.bf16.mxu0 0
    %1511 = vmatpush1.bf16.msra.mxu0 0
    %1512 = vmatprep.subr.bf16.mxu0 0
    %1513 = vmatpush1.bf16.msra.mxu0 0
    %1514 = vmatprep.subr.bf16.mxu0 0
    %1515 = vmatpush1.bf16.msra.mxu0 0
    %1516 = vmatprep.subr.bf16.mxu0 0
    %1517 = vmatpush1.bf16.msra.mxu0 0
    %1518 = vmatprep.subr.bf16.mxu0 0
    %1519 = vmatpush1.bf16.msra.mxu0 0
    %1520 = vmatprep.subr.bf16.mxu0 0
    %1521 = vmatpush1.bf16.msra.mxu0 0
    %1522 = vmatprep.subr.bf16.mxu0 0
    %1523 = vmatpush1.bf16.msra.mxu0 0
    %1524 = vmatprep.subr.bf16.mxu0 0
    %1525 = vmatpush1.bf16.msra.mxu0 0
    %1526 = vmatprep.subr.bf16.mxu0 0
    %1527 = vmatpush1.bf16.msra.mxu0 0
    %1528 = vmatprep.mubr.bf16.mxu0 0
    %1529 = vmatmul.mubr.bf16.gmra.mrb[0].mxu0 %v1494
    %v1530 = vpop.f32.mrb[0].mxu0
    %v1531 = vadd.f32 %v1480, %v1530
    %v1532 = vpop.f32.mrb[0].mxu0
    %v1533 = vpop.f32.mrb[0].mxu0
    %v1534 = vadd.f32 %v1480, %v1533
    %v1535 = vpop.f32.mrb[0].mxu0
    %1536 = vdwg.mxu0
    %v1537 = vmul.f32 %v1531, %v1531
    %v1538 = vmul.f32 %v1534, %v1534
    %v1539 = vmul.f32 %v1531, %v1537
    %v1540 = vmul.f32 %v1534, %v1538
    %v1541 = vmul.f32 %v1539, 0.044715
    %v1542 = vmul.f32 %v1540, 0.044715
    %v1543 = vadd.f32 %v1531, %v1541
    %v1544 = vadd.f32 %v1534, %v1542
    %v1545 = vmul.f32 %v1543, 0.7978846
    %v1546 = vmul.f32 %v1544, 0.7978846
    %v1547 = vtanh.pop %v1545
    %v1548 = vtanh.pop %v1546
    %v1549 = vadd.f32 %v1547, 1.0
    %v1550 = vadd.f32 %v1548, 1.0
    %v1551 = vmul.f32 %v1549, 0.5
    %v1552 = vmul.f32 %v1550, 0.5
    %v1553 = vmul.f32 %v1531, %v1551
    %v1554 = vmul.f32 %v1534, %v1552
    %s1555 = scalar_lea.vmem %s4, 64
    %v1556 = vld [vmem:[%s1555] sm:$0xf]
    %v1557 = vld [vmem:[%s1555 + $0x4] sm:$0xf]
    %v1558 = vld [vmem:[%s1555 + $0x8] sm:$0xf]
    %v1559 = vld [vmem:[%s1555 + $0xc] sm:$0xf]
    %v1560 = vld [vmem:[%s1555 + $0x10] sm:$0xf]
    %v1561 = vld [vmem:[%s1555 + $0x14] sm:$0xf]
    %v1562 = vld [vmem:[%s1555 + $0x18] sm:$0xf]
    %v1563 = vld [vmem:[%s1555 + $0x1c] sm:$0xf]
    %v1564 = vld [vmem:[%s1555 + $0x20] sm:$0xf]
    %v1565 = vld [vmem:[%s1555 + $0x24] sm:$0xf]
    %v1566 = vld [vmem:[%s1555 + $0x28] sm:$0xf]
    %v1567 = vld [vmem:[%s1555 + $0x2c] sm:$0xf]
    %v1568 = vld [vmem:[%s1555 + $0x30] sm:$0xf]
    %v1569 = vld [vmem:[%s1555 + $0x34] sm:$0xf]
    %v1570 = vld [vmem:[%s1555 + $0x38] sm:$0xf]
    %v1571 = vld [vmem:[%s1555 + $0x3c] sm:$0xf]
    %v1572 = vpack.c.bf16 %v1554, %v1553
    %v1573 = vld [vmem:[%s5 + $0xd] sm:$0x1]
    %v1574 = vlaneseq
    %v1575 = vshrl.u32 %v1574, 7
    %v1576 = vsub.s32 0, %v1575
    %v1577 = vrot.slane %v1573, %v1576
    %v1594 = vunpack.c.l.b16 %v1556
    %v1595 = vunpack.c.l.b16 %v1557
    %v1596 = vunpack.c.l.b16 %v1558
    %v1597 = vunpack.c.l.b16 %v1559
    %v1598 = vunpack.c.l.b16 %v1560
    %v1599 = vunpack.c.l.b16 %v1561
    %v1600 = vunpack.c.l.b16 %v1562
    %v1601 = vunpack.c.l.b16 %v1563
    %v1602 = vunpack.c.l.b16 %v1564
    %v1603 = vunpack.c.l.b16 %v1565
    %v1604 = vunpack.c.l.b16 %v1566
    %v1605 = vunpack.c.l.b16 %v1567
    %v1606 = vunpack.c.l.b16 %v1568
    %v1607 = vunpack.c.l.b16 %v1569
    %v1608 = vunpack.c.l.b16 %v1570
    %v1609 = vunpack.c.l.b16 %v1571
    %v1610 = vpack.c.b16 %v1595, %v1594
    %v1611 = vpack.c.b16 %v1597, %v1596
    %v1612 = vpack.c.b16 %v1599, %v1598
    %v1613 = vpack.c.b16 %v1601, %v1600
    %v1614 = vpack.c.b16 %v1603, %v1602
    %v1615 = vpack.c.b16 %v1605, %v1604
    %v1616 = vpack.c.b16 %v1607, %v1606
    %v1617 = vpack.c.b16 %v1609, %v1608
    %1626 = vmatprep.subr.bf16.mxu0 0
    %1627 = vmatpush1.bf16.msra.mxu0 %v1610
    %1628 = vmatprep.subr.bf16.mxu0 0
    %1629 = vmatpush1.bf16.msra.mxu0 %v1611
    %1630 = vmatprep.subr.bf16.mxu0 0
    %1631 = vmatpush1.bf16.msra.mxu0 %v1612
    %1632 = vmatprep.subr.bf16.mxu0 0
    %1633 = vmatpush1.bf16.msra.mxu0 %v1613
    %1634 = vmatprep.subr.bf16.mxu0 0
    %1635 = vmatpush1.bf16.msra.mxu0 %v1614
    %1636 = vmatprep.subr.bf16.mxu0 0
    %1637 = vmatpush1.bf16.msra.mxu0 %v1615
    %1638 = vmatprep.subr.bf16.mxu0 0
    %1639 = vmatpush1.bf16.msra.mxu0 %v1616
    %1640 = vmatprep.subr.bf16.mxu0 0
    %1641 = vmatpush1.bf16.msra.mxu0 %v1617
    %1642 = vmatprep.subr.bf16.mxu0 0
    %1643 = vmatpush1.bf16.msra.mxu0 0
    %1644 = vmatprep.subr.bf16.mxu0 0
    %1645 = vmatpush1.bf16.msra.mxu0 0
    %1646 = vmatprep.subr.bf16.mxu0 0
    %1647 = vmatpush1.bf16.msra.mxu0 0
    %1648 = vmatprep.subr.bf16.mxu0 0
    %1649 = vmatpush1.bf16.msra.mxu0 0
    %1650 = vmatprep.subr.bf16.mxu0 0
    %1651 = vmatpush1.bf16.msra.mxu0 0
    %1652 = vmatprep.subr.bf16.mxu0 0
    %1653 = vmatpush1.bf16.msra.mxu0 0
    %1654 = vmatprep.subr.bf16.mxu0 0
    %1655 = vmatpush1.bf16.msra.mxu0 0
    %1656 = vmatprep.subr.bf16.mxu0 0
    %1657 = vmatpush1.bf16.msra.mxu0 0
    %1658 = vmatprep.mubr.bf16.mxu0 0
    %1659 = vmatmul.mubr.bf16.gmra.mrb[0].mxu0 %v1572
    %v1660 = vpop.f32.mrb[0].mxu0
    %v1661 = vadd.f32 %v1577, %v1660
    %v1662 = vpop.f32.mrb[0].mxu0
    %v1663 = vpop.f32.mrb[0].mxu0
    %v1664 = vadd.f32 %v1577, %v1663
    %v1665 = vpop.f32.mrb[0].mxu0
    %1666 = vdwg.mxu0
    %v1667 = vadd.f32 %v1469, %v1661
    %v1668 = vadd.f32 %v1470, %v1664
    %v1669 = vld [vmem:[%s5 + $0xe] sm:$0x1]
    %v1670 = vld [vmem:[%s5 + $0xf] sm:$0x1]
    %v1671 = vsel %vm264, %v1667, 0.0
    %1672 = vadd.xlane.f32.xlu0 %v1671
    %v1673 = vpop.xlane.xlu0 %1672
    %v1674 = vsel %vm264, %v1668, 0.0
    %1675 = vadd.xlane.f32.xlu0 %v1674
    %v1676 = vpop.xlane.xlu0 %1675
    %v1677 = vmul.f32 %v1673, %v271
    %v1678 = vmul.f32 %v1676, %v271
    %v1679 = vsub.f32 %v1667, %v1677
    %v1680 = vsub.f32 %v1668, %v1678
    %v1681 = vmul.f32 %v1679, %v1679
    %v1682 = vmul.f32 %v1680, %v1680
    %v1683 = vsel %vm264, %v1681, 0.0
    %1684 = vadd.xlane.f32.xlu0 %v1683
    %v1685 = vpop.xlane.xlu0 %1684
    %v1686 = vsel %vm264, %v1682, 0.0
    %1687 = vadd.xlane.f32.xlu0 %v1686
    %v1688 = vpop.xlane.xlu0 %1687
    %v1689 = vmul.f32 %v1685, %v271
    %v1690 = vmul.f32 %v1688, %v271
    %v1691 = vadd.f32 %v1689, 1e-12
    %v1692 = vadd.f32 %v1690, 1e-12
    %v1693 = vrsqrt.pop %v1691
    %v1694 = vrsqrt.pop %v1692
    %v1695 = vmul.f32 %v1679, %v1693
    %v1696 = vmul.f32 %v1680, %v1694
    %v1697 = vlaneseq
    %v1698 = vshrl.u32 %v1697, 7
    %v1699 = vsub.s32 0, %v1698
    %v1700 = vrot.slane %v1669, %v1699
    %v1701 = vmul.f32 %v1695, %v1700
    %v1702 = vmul.f32 %v1696, %v1700
    %v1703 = vlaneseq
    %v1704 = vshrl.u32 %v1703, 7
    %v1705 = vsub.s32 0, %v1704
    %v1706 = vrot.slane %v1670, %v1705
    %v1707 = vadd.f32 %v1701, %v1706
    %v1708 = vadd.f32 %v1702, %v1706
    %v1710 = vrot.slane %v1708, 7
    %vm1712 = vcmask 1040384
    %v1713 = vsel %vm1712, %v1707, %v1710
    %s1714 = scalar_lea.vmem %s3, 96
    %v1715 = vld [vmem:[%s1714 + $0x8] sm:$0xf]
    %v1716 = vld [vmem:[%s1714 + $0x14] sm:$0xf]
    %v1717 = vld [vmem:[%s1714 + $0x20] sm:$0xf]
    %v1718 = vld [vmem:[%s1714 + $0x2c] sm:$0xf]
    %v1719 = vpack.c.bf16 %v1713, %v1713
    %v1720 = vld [vmem:[%s5 + $0x12] sm:$0x1]
    %v1721 = vlaneseq
    %v1722 = vshrl.u32 %v1721, 7
    %v1723 = vsub.s32 0, %v1722
    %v1724 = vrot.slane %v1720, %v1723
    %v1729 = vunpack.c.l.b16 %v1715
    %v1730 = vunpack.c.l.b16 %v1716
    %v1731 = vunpack.c.l.b16 %v1717
    %v1732 = vunpack.c.l.b16 %v1718
    %v1733 = vpack.c.b16 %v1730, %v1729
    %v1734 = vpack.c.b16 %v1732, %v1731
    %v1738 = vsel %vm264, %v1719, 0
    %1740 = vmatprep.subr.bf16.mxu0 0
    %1741 = vmatpush1.bf16.msra.mxu0 %v1733
    %1742 = vmatprep.subr.bf16.mxu0 0
    %1743 = vmatpush1.bf16.msra.mxu0 %v1734
    %1744 = vmatprep.subr.bf16.mxu0 0
    %1745 = vmatpush1.bf16.msra.mxu0 0
    %1746 = vmatprep.subr.bf16.mxu0 0
    %1747 = vmatpush1.bf16.msra.mxu0 0
    %1748 = vmatprep.subr.bf16.mxu0 0
    %1749 = vmatpush1.bf16.msra.mxu0 0
    %1750 = vmatprep.subr.bf16.mxu0 0
    %1751 = vmatpush1.bf16.msra.mxu0 0
    %1752 = vmatprep.subr.bf16.mxu0 0
    %1753 = vmatpush1.bf16.msra.mxu0 0
    %1754 = vmatprep.subr.bf16.mxu0 0
    %1755 = vmatpush1.bf16.msra.mxu0 0
    %1756 = vmatprep.subr.bf16.mxu0 0
    %1757 = vmatpush1.bf16.msra.mxu0 0
    %1758 = vmatprep.subr.bf16.mxu0 0
    %1759 = vmatpush1.bf16.msra.mxu0 0
    %1760 = vmatprep.subr.bf16.mxu0 0
    %1761 = vmatpush1.bf16.msra.mxu0 0
    %1762 = vmatprep.subr.bf16.mxu0 0
    %1763 = vmatpush1.bf16.msra.mxu0 0
    %1764 = vmatprep.subr.bf16.mxu0 0
    %1765 = vmatpush1.bf16.msra.mxu0 0
    %1766 = vmatprep.subr.bf16.mxu0 0
    %1767 = vmatpush1.bf16.msra.mxu0 0
    %1768 = vmatprep.subr.bf16.mxu0 0
    %1769 = vmatpush1.bf16.msra.mxu0 0
    %1770 = vmatprep.subr.bf16.mxu0 0
    %1771 = vmatpush1.bf16.msra.mxu0 0
    %1772 = vmatprep.mubr.bf16.mxu0 0
    %1773 = vmatmul.mubr.bf16.gmra.mrb[0].mxu0 %v1738
    %v1774 = vpop.f32.mrb[0].mxu0
    %v1775 = vadd.f32 %v1724, %v1774
    %v1776 = vpop.f32.mrb[0].mxu0
    %v1777 = vpop.f32.mrb[0].mxu0
    %v1778 = vpop.f32.mrb[0].mxu0
    %1779 = vdwg.mxu0
    %v1780 = vtanh.pop %v1775
    %v1781 = vld [vmem:[%s1714] sm:$0xf]
    %v1782 = vld [vmem:[%s1714 + $0xc] sm:$0xf]
    %v1783 = vld [vmem:[%s1714 + $0x18] sm:$0xf]
    %v1784 = vld [vmem:[%s1714 + $0x24] sm:$0xf]
    %v1785 = vpack.c.bf16 %v1780, %v1780
    %v1786 = vld [vmem:[%s5 + $0x13] sm:$0x1]
    %v1787 = vlaneseq
    %v1788 = vshrl.u32 %v1787, 7
    %v1789 = vsub.s32 0, %v1788
    %v1790 = vrot.slane %v1786, %v1789
    %v1795 = vunpack.c.l.b16 %v1781
    %v1796 = vunpack.c.l.b16 %v1782
    %v1797 = vunpack.c.l.b16 %v1783
    %v1798 = vunpack.c.l.b16 %v1784
    %v1799 = vpack.c.b16 %v1796, %v1795
    %v1800 = vpack.c.b16 %v1798, %v1797
    %v1804 = vsel %vm264, %v1785, 0
    %1806 = vmatprep.subr.bf16.mxu0 0
    %1807 = vmatpush1.bf16.msra.mxu0 %v1799
    %1808 = vmatprep.subr.bf16.mxu0 0
    %1809 = vmatpush1.bf16.msra.mxu0 %v1800
    %1810 = vmatprep.subr.bf16.mxu0 0
    %1811 = vmatpush1.bf16.msra.mxu0 0
    %1812 = vmatprep.subr.bf16.mxu0 0
    %1813 = vmatpush1.bf16.msra.mxu0 0
    %1814 = vmatprep.subr.bf16.mxu0 0
    %1815 = vmatpush1.bf16.msra.mxu0 0
    %1816 = vmatprep.subr.bf16.mxu0 0
    %1817 = vmatpush1.bf16.msra.mxu0 0
    %1818 = vmatprep.subr.bf16.mxu0 0
    %1819 = vmatpush1.bf16.msra.mxu0 0
    %1820 = vmatprep.subr.bf16.mxu0 0
    %1821 = vmatpush1.bf16.msra.mxu0 0
    %1822 = vmatprep.subr.bf16.mxu0 0
    %1823 = vmatpush1.bf16.msra.mxu0 0
    %1824 = vmatprep.subr.bf16.mxu0 0
    %1825 = vmatpush1.bf16.msra.mxu0 0
    %1826 = vmatprep.subr.bf16.mxu0 0
    %1827 = vmatpush1.bf16.msra.mxu0 0
    %1828 = vmatprep.subr.bf16.mxu0 0
    %1829 = vmatpush1.bf16.msra.mxu0 0
    %1830 = vmatprep.subr.bf16.mxu0 0
    %1831 = vmatpush1.bf16.msra.mxu0 0
    %1832 = vmatprep.subr.bf16.mxu0 0
    %1833 = vmatpush1.bf16.msra.mxu0 0
    %1834 = vmatprep.subr.bf16.mxu0 0
    %1835 = vmatpush1.bf16.msra.mxu0 0
    %1836 = vmatprep.subr.bf16.mxu0 0
    %1837 = vmatpush1.bf16.msra.mxu0 0
    %1838 = vmatprep.mubr.bf16.mxu0 0
    %1839 = vmatmul.mubr.bf16.gmra.mrb[0].mxu0 %v1804
    %v1840 = vpop.f32.mrb[0].mxu0
    %v1841 = vadd.f32 %v1790, %v1840
    %v1842 = vpop.f32.mrb[0].mxu0
    %v1843 = vpop.f32.mrb[0].mxu0
    %v1844 = vpop.f32.mrb[0].mxu0
    %1845 = vdwg.mxu0
    %1846 = vst [vmem:[#allocation2] sm:$0x3] %v1841
    // Predicated region
    $region26: #{_lambda_.1} parent=1 // pred_check
      _
    $region27: #{_lambda_.1} parent=1 // pred_check_branch
      %1848 = sbr.rel (0) target = $region29
    $region28: #{_lambda_.1} parent=1 // pred_region
      %s1850 = ssub.s32 32, 32
      %1851 = vsyncadd [#allocation3], %s1850
      %s1853 = sshll.u32 [#allocation2], 4
      %s1854 = int_to_ptr.vmem [resolvable:$true] %s1853
      %1856 = dma.vmem_to_hbm [thread:$0]  %s1854, 32, %s6, [#allocation3]
    $region29: #{_lambda_.1} parent=1 // pred_fallthru
      _
    // Predicated region
    $region30: #{_lambda_.1} parent=1 // pred_check
      _
    $region31: #{_lambda_.1} parent=1 // pred_check_branch
      %1858 = sbr.rel (0) target = $region33
    $region32: #{_lambda_.1} parent=1 // pred_region
      %1859 = dma.done [#allocation3], 32
    $region33: #{_lambda_.1} parent=1 // pred_fallthru
      _
    %1860 = vsyncpa [#allocation3], 1

</llo_original>
